<compile_context>
chip_gen: v6e
topology: v6e:2x2x1
jax: 0.10.0
libtpu: 0.0.40
codegen_flags: <defaults>
</compile_context>

<pallas_src>
import functools
import math

import jax
import jax.numpy as jnp
from jax.experimental import pallas as pl
from jax.experimental.pallas import tpu as pltpu


# ----------------------------------------------------------------------------
# Fused conv3x3 (+relu)(+2x2 maxpool) kernel over halo'd row strips
# ----------------------------------------------------------------------------
def _conv3x3_kernel(x_ref, top_ref, bot_ref, w_ref, b_ref, pad_ref, *rest,
                    fuse_relu, fuse_pool, emit):
    # x_ref  : (1, sh, W, Cin)   strip body (operand dtype: bf16, f32 for layer 0)
    # top_ref: (1, 1, W, Cin)    row above the strip (clamped at the border)
    # bot_ref: (1, 1, W, Cin)    row below the strip (clamped at the border)
    # w_ref  : (3, 3*Cin, Cout)  dy-folded weights: w_ref[dx, dy*Cin+c, o] = w[dy,dx,c,o]
    # b_ref  : (1, Cout)         f32 bias
    # pad_ref: (1, 1, Cin)       halo fill value (ImageNet mean for layer 0, else 0)
    # rest   : emitted output refs..., xcat_ref, acc_ref
    n_out = len(emit)
    o_refs = rest[:n_out]
    xcat_ref, acc_ref = rest[n_out:]

    sh, wp2, k3 = xcat_ref.shape
    wi = wp2 - 2
    cin = k3 // 3
    cout = acc_ref.shape[-1]

    s = pl.program_id(1)
    last = pl.num_programs(1) - 1

    body = x_ref[0]                                    # (sh, wi, cin)
    pad_row = pad_ref[...]                             # (1, 1, cin)

    # ---- build the dy-folded matmul operand in VMEM ----
    # Border-only pad fill (left/right single columns across all 3 dy blocks).
    pad_col3 = jnp.broadcast_to(jnp.tile(pad_row, (1, 1, 3)), (sh, 1, k3))
    xcat_ref[:, 0:1, :] = pad_col3
    xcat_ref[:, wi + 1:wi + 2, :] = pad_col3

    # dy = 1 (centre tap): the strip body itself.
    xcat_ref[:, 1:wi + 1, cin:2 * cin] = body
    # dy = 0 (rows shifted up): halo row on top, body[:-1] below.
    top_row = jnp.where(s == 0,
                        jnp.broadcast_to(pad_row, (1, wi, cin)), top_ref[0])
    xcat_ref[0:1, 1:wi + 1, 0:cin] = top_row
    xcat_ref[1:sh, 1:wi + 1, 0:cin] = body[0:sh - 1]
    # dy = 2 (rows shifted down): body[1:] on top, halo row at the bottom.
    xcat_ref[0:sh - 1, 1:wi + 1, 2 * cin:3 * cin] = body[1:sh]
    bot_row = jnp.where(s == last,
                        jnp.broadcast_to(pad_row, (1, wi, cin)), bot_ref[0])
    xcat_ref[sh - 1:sh, 1:wi + 1, 2 * cin:3 * cin] = bot_row

    # ---- 3 accumulating MXU matmuls, K = 3*Cin, f32 VMEM accumulator ----
    acc_ref[...] = jnp.dot(xcat_ref[:, 0:wi, :].reshape(sh * wi, k3), w_ref[0],
                           preferred_element_type=jnp.float32)
    for dx in (1, 2):
        acc_ref[...] += jnp.dot(
            xcat_ref[:, dx:dx + wi, :].reshape(sh * wi, k3), w_ref[dx],
            preferred_element_type=jnp.float32)

    # ---- epilogue: bias (+relu) (+2x2/2 maxpool), multiple emitted outputs ----
    y = acc_ref[...] + b_ref[...]                      # (sh*wi, cout) f32
    oi = 0
    if "pre" in emit:
        o_refs[oi][...] = y.reshape(1, sh, wi, cout).astype(o_refs[oi].dtype)
        oi += 1
    if fuse_relu:
        y = jnp.maximum(y, 0.0)
        if "relu" in emit:
            o_refs[oi][...] = y.reshape(1, sh, wi, cout).astype(o_refs[oi].dtype)
            oi += 1
    if fuse_pool:
        yp = jnp.max(y.reshape(sh // 2, 2, wi // 2, 2, cout), axis=(1, 3))
        o_refs[oi][...] = yp.reshape(1, sh // 2, wi // 2, cout).astype(
            o_refs[oi].dtype)


def _pick_strip_rows(h, need_even, max_rows):
    """Largest divisor of h that is <= max_rows (even if pooling is fused)."""
    step = 2 if need_even else 1
    best = None
    for cand in range(step, min(h, max_rows) + 1, step):
        if h % cand == 0:
            best = cand
    return best if best is not None else h


def conv3x3_fused(x, w_fold, b, pad_val, *, fuse_relu, fuse_pool, emit,
                  max_strip_rows=32):
    n, h, wi, cin = x.shape
    k3, cout = w_fold.shape[1], w_fold.shape[2]
    if fuse_pool:
        assert h % 2 == 0 and wi % 2 == 0
    sh = _pick_strip_rows(h, fuse_pool, max_strip_rows)
    assert sh >= 2 and h % sh == 0
    ns = h // sh

    out_shapes, out_specs = [], []
    for tag in emit:
        if tag == "pool":
            out_shapes.append(
                jax.ShapeDtypeStruct((n, h // 2, wi // 2, cout), jnp.bfloat16))
            out_specs.append(pl.BlockSpec((1, sh // 2, wi // 2, cout),
                                          lambda bb, ss: (bb, ss, 0, 0)))
        else:
            out_shapes.append(
                jax.ShapeDtypeStruct((n, h, wi, cout), jnp.bfloat16))
            out_specs.append(pl.BlockSpec((1, sh, wi, cout),
                                          lambda bb, ss: (bb, ss, 0, 0)))

    in_specs = [
        # strip body
        pl.BlockSpec((1, sh, wi, cin), lambda bb, ss: (bb, ss, 0, 0)),
        # top halo row (1-row block -> block index == row index, clamped)
        pl.BlockSpec((1, 1, wi, cin),
                     lambda bb, ss: (bb, jnp.maximum(ss * sh - 1, 0), 0, 0)),
        # bottom halo row
        pl.BlockSpec((1, 1, wi, cin),
                     lambda bb, ss: (bb, jnp.minimum(ss * sh + sh, h - 1), 0, 0)),
        # dy-folded weights, bias, halo fill value (whole-array blocks)
        pl.BlockSpec((3, k3, cout), lambda bb, ss: (0, 0, 0)),
        pl.BlockSpec((1, cout), lambda bb, ss: (0, 0)),
        pl.BlockSpec((1, 1, cin), lambda bb, ss: (0, 0, 0)),
    ]

    scratch_shapes = [
        pltpu.VMEM((sh, wi + 2, k3), x.dtype),      # dy-folded operand strip
        pltpu.VMEM((sh * wi, cout), jnp.float32),   # f32 accumulator
    ]

    flops = 2 * n * h * wi * cout * k3 * 3
    bytes_accessed = (x.size * x.dtype.itemsize
                      + w_fold.size * w_fold.dtype.itemsize
                      + sum(2 * math.prod(o.shape) for o in out_shapes))

    kernel = functools.partial(_conv3x3_kernel, fuse_relu=fuse_relu,
                               fuse_pool=fuse_pool, emit=tuple(emit))

    outs = pl.pallas_call(
        kernel,
        out_shape=tuple(out_shapes),
        grid=(n, ns),
        in_specs=in_specs,
        out_specs=tuple(out_specs),
        scratch_shapes=scratch_shapes,
        compiler_params=pltpu.CompilerParams(
            dimension_semantics=("parallel", "parallel")),
        cost_estimate=pl.CostEstimate(flops=flops, transcendentals=0,
                                      bytes_accessed=bytes_accessed),
    )(x, x, x, w_fold, b, pad_val)
    if not isinstance(outs, (list, tuple)):
        outs = (outs,)
    return tuple(outs)


# ----------------------------------------------------------------------------
# Model: truncated VGG16 features + (folded) ImageNet normalization
# ----------------------------------------------------------------------------
VGG16_CFG = [64, 64, "M", 128, 128, "M", 256, 256, 256, "M",
             512, 512, 512, "M", 512, 512, 512, "M"]


def _vgg16_feature_layers():
    layers, in_c = [], 3
    for v in VGG16_CFG:
        if v == "M":
            layers.append(("pool", None))
        else:
            layers.append(("conv", (in_c, v)))
            layers.append(("relu", None))
            in_c = v
    return layers


class VGGIntermediatePallas:
    def __init__(self, layers_to_extract, key, max_strip_rows=32):
        self.layers_to_extract = set(layers_to_extract)
        self.max_layer = max(layers_to_extract)
        self.max_strip_rows = max_strip_rows
        full = _vgg16_feature_layers()
        assert self.max_layer < len(full)
        self.layer_kinds = full[:self.max_layer + 1]

        self.mean = jnp.array([0.485, 0.456, 0.406], jnp.float32)
        self.std = jnp.array([0.229, 0.224, 0.225], jnp.float32)

        # Deterministic synthetic weights.
        # TODO(synk): pretrained torchvision weights need file IO, not done here.
        self.raw_params = {}
        for idx, (kind, cfg) in enumerate(self.layer_kinds):
            if kind == "conv":
                cin, cout = cfg
                key, kw, kb = jax.random.split(key, 3)
                w = jax.random.normal(kw, (3, 3, cin, cout), jnp.float32) * 0.05
                bb = jax.random.normal(kb, (cout,), jnp.float32) * 0.01
                self.raw_params[idx] = (w, bb)

        self.ops = self._build_schedule()

    def _build_schedule(self):
        """Every op is one fused conv(+relu)(+pool).  Intermediate tensors that
        are extraction points are emitted as extra kernel outputs."""
        kinds, ext, ops = self.layer_kinds, self.layers_to_extract, []
        inv_std = 1.0 / self.std
        i = 0
        while i <= self.max_layer:
            kind, cfg = kinds[i]
            assert kind == "conv"
            cin, cout = cfg
            w, bb = self.raw_params[i]
            if i == 0:
                # Fold ImageNet normalization into conv0 (exact: the halo is
                # filled with the raw per-channel mean).  Layer 0 keeps f32
                # operands (tiny K=9; raw image is f32).
                w = w * inv_std[None, None, :, None]
                bb = bb - jnp.einsum("yxco,c->o", w, self.mean)
                pad = self.mean.reshape(1, 1, cin).astype(jnp.float32)
                op_dtype = jnp.float32
            else:
                pad = jnp.zeros((1, 1, cin), jnp.bfloat16)
                op_dtype = jnp.bfloat16
            # dy-folded slab: w_fold[dx, dy*cin + c, o] = w[dy, dx, c, o]
            w_fold = jnp.transpose(w, (1, 0, 2, 3)).reshape(
                3, 3 * cin, cout).astype(op_dtype)

            fuse_relu = (i + 1 <= self.max_layer and kinds[i + 1][0] == "relu")
            fuse_pool = (fuse_relu and i + 2 <= self.max_layer
                         and kinds[i + 2][0] == "pool")
            carry = "pool" if fuse_pool else ("relu" if fuse_relu else "pre")

            emit, extract = [], {}
            if (i in ext) or carry == "pre":
                emit.append("pre")
            if fuse_relu and ((i + 1 in ext) or carry == "relu"):
                emit.append("relu")
            if fuse_pool:
                emit.append("pool")
            if i in ext:
                extract["pre"] = i
            if fuse_relu and (i + 1) in ext:
                extract["relu"] = i + 1
            if fuse_pool and (i + 2) in ext:
                extract["pool"] = i + 2

            ops.append(dict(w_fold=w_fold,
                            b=bb.reshape(1, cout).astype(jnp.float32),
                            pad=pad, fuse_relu=fuse_relu, fuse_pool=fuse_pool,
                            emit=tuple(emit), carry=carry, extract=extract))
            i += 1 + int(fuse_relu) + int(fuse_pool)
        return ops

    def __call__(self, img_nchw):
        # NCHW (PyTorch) -> NHWC so channels sit on the 128-lane axis.
        x = jnp.transpose(img_nchw, (0, 2, 3, 1)).astype(jnp.float32)
        outputs = []
        for op in self.ops:
            outs = conv3x3_fused(
                x, op["w_fold"], op["b"], op["pad"],
                fuse_relu=op["fuse_relu"], fuse_pool=op["fuse_pool"],
                emit=op["emit"], max_strip_rows=self.max_strip_rows)
            named = dict(zip(op["emit"], outs))
            for tag in op["emit"]:
                if tag in op["extract"]:
                    outputs.append(jnp.transpose(
                        named[tag].astype(jnp.float32), (0, 3, 1, 2)))
            x = named[op["carry"]]
        return outputs


# ----------------------------------------------------------------------------
# Pure-JAX reference (original unfused / unfolded f32 semantics)
# ----------------------------------------------------------------------------
def ref_forward(img_nchw, model):
    x = jnp.transpose(img_nchw, (0, 2, 3, 1))
    x = (x - model.mean) / model.std
    outs = []
    for idx, (kind, cfg) in enumerate(model.layer_kinds):
        if kind == "conv":
            w, b = model.raw_params[idx]
            x = jax.lax.conv_general_dilated(
                x, w, (1, 1), "SAME",
                dimension_numbers=("NHWC", "HWIO", "NHWC")) + b
        elif kind == "relu":
            x = jnp.maximum(x, 0.0)
        else:
            x = jax.lax.reduce_window(
                x, -jnp.inf, jax.lax.max, (1, 2, 2, 1), (1, 2, 2, 1), "VALID")
        if idx in model.layers_to_extract:
            outs.append(jnp.transpose(x, (0, 3, 1, 2)))
    return outs


# ----------------------------------------------------------------------------
if __name__ == "__main__":
    # VGG16 feature indices:
    #   0 conv(3->64)  1 relu  2 conv(64->64)  3 relu  4 pool
    #   5 conv(64->128) 6 relu 7 conv(128->128) 8 relu 9 pool
    # Extract {2,3,4,9}: exercises pre-relu / post-relu / post-pool extraction
    # from a single fused conv call, plus carry-only fused convs.
    layers_to_extract = [2, 3, 4, 9]

    key = jax.random.PRNGKey(0)
    k_img, k_params = jax.random.split(key)

    # 32x32 with 8-row strips -> top / interior / bottom halo strips are all
    # exercised.  (Real 224x224 images would use the default 32-row strips.)
    img = jax.random.uniform(k_img, (2, 3, 32, 32), jnp.float32)  # NCHW, [0,1)

    model = VGGIntermediatePallas(layers_to_extract, k_params, max_strip_rows=8)

    outs = jax.block_until_ready(model(img))

    refs = ref_forward(img, model)
    assert len(outs) == len(refs) == len(layers_to_extract)
    for o, r in zip(outs, refs):
        assert o.shape == r.shape and o.dtype == r.dtype
        err = float(jnp.max(jnp.abs(o - r)))
        scale = float(jnp.max(jnp.abs(r)))
        # bf16 inter-layer activations / bf16 MXU operands vs. full-f32 ref.
        assert err <= 5e-2 + 2e-2 * scale, (err, scale)

    print("KERNEL_OK")
</pallas_src>

<mosaic_0001>
module attributes {stable_mosaic.version = 11 : i64} {
  func.func @_conv3x3_kernel(%arg0: i32, %arg1: i32, %arg2: memref<1x8x32x3xf32, #tpu.memory_space<vmem>>, %arg3: memref<1x1x32x3xf32, #tpu.memory_space<vmem>>, %arg4: memref<1x1x32x3xf32, #tpu.memory_space<vmem>>, %arg5: memref<3x9x64xf32, #tpu.memory_space<vmem>>, %arg6: memref<1x64xf32, #tpu.memory_space<vmem>>, %arg7: memref<1x1x3xf32, #tpu.memory_space<vmem>>, %arg8: memref<1x8x32x64xbf16, #tpu.memory_space<vmem>>, %arg9: memref<8x34x9xf32, #tpu.memory_space<vmem>>, %arg10: memref<256x64xf32, #tpu.memory_space<vmem>>) attributes {dimension_semantics = [#tpu.dimension_semantics<parallel>, #tpu.dimension_semantics<parallel>], iteration_bounds = array<i64: 2, 4>, scalar_prefetch = 0 : i64, scratch_operands = 2 : i64, tpu.core_type = #tpu.core_type<tc>, window_params = [{transform_indices = @transform_0, window_bounds = array<i64: 1, 8, 32, 3>}, {transform_indices = @transform_1, window_bounds = array<i64: 1, 1, 32, 3>}, {transform_indices = @transform_2, window_bounds = array<i64: 1, 1, 32, 3>}, {pipeline_mode = #tpu.pipeline_mode<synchronous>, transform_indices = @transform_3, window_bounds = array<i64: 3, 9, 64>}, {pipeline_mode = #tpu.pipeline_mode<synchronous>, transform_indices = @transform_4, window_bounds = array<i64: 1, 64>}, {pipeline_mode = #tpu.pipeline_mode<synchronous>, transform_indices = @transform_5, window_bounds = array<i64: 1, 1, 3>}, {transform_indices = @transform_6, window_bounds = array<i64: 1, 8, 32, 64>}]} {
    %c0 = arith.constant 0 : index
    %c0_0 = arith.constant 0 : index
    %c0_1 = arith.constant 0 : index
    %c0_2 = arith.constant 0 : index
    %0 = vector.load %arg2[%c0, %c0_0, %c0_1, %c0_2] : memref<1x8x32x3xf32, #tpu.memory_space<vmem>>, vector<1x8x32x3xf32>
    %1 = vector.shape_cast %0 : vector<1x8x32x3xf32> to vector<8x32x3xf32>
    %c0_3 = arith.constant 0 : index
    %c0_4 = arith.constant 0 : index
    %c0_5 = arith.constant 0 : index
    %2 = vector.load %arg7[%c0_3, %c0_4, %c0_5] : memref<1x1x3xf32, #tpu.memory_space<vmem>>, vector<1x1x3xf32>
    %3 = tpu.concatenate %2, %2, %2 in 2 : vector<1x1x3xf32>, vector<1x1x3xf32>, vector<1x1x3xf32> -> vector<1x1x9xf32>
    %4 = vector.shape_cast %3 : vector<1x1x9xf32> to vector<1x1x9xf32>
    %5 = vector.broadcast %4 : vector<1x1x9xf32> to vector<8x1x9xf32>
    %c0_6 = arith.constant 0 : index
    %c0_7 = arith.constant 0 : index
    %c0_8 = arith.constant 0 : index
    %6 = vector.load %arg9[%c0_6, %c0_7, %c0_8] : memref<8x34x9xf32, #tpu.memory_space<vmem>>, vector<8x1x9xf32>
    tpu.vector_store %arg9[%c0_6, %c0_7, %c0_8], %5 {strides = array<i32>} : memref<8x34x9xf32, #tpu.memory_space<vmem>>, vector<8x1x9xf32>,
    %c0_9 = arith.constant 0 : index
    %c33 = arith.constant 33 : index
    %c0_10 = arith.constant 0 : index
    %7 = vector.load %arg9[%c0_9, %c33, %c0_10] : memref<8x34x9xf32, #tpu.memory_space<vmem>>, vector<8x1x9xf32>
    tpu.vector_store %arg9[%c0_9, %c33, %c0_10], %5 {strides = array<i32>} : memref<8x34x9xf32, #tpu.memory_space<vmem>>, vector<8x1x9xf32>,
    %c0_11 = arith.constant 0 : index
    %c1 = arith.constant 1 : index
    %c3 = arith.constant 3 : index
    %8 = vector.load %arg9[%c0_11, %c1, %c3] : memref<8x34x9xf32, #tpu.memory_space<vmem>>, vector<8x32x3xf32>
    tpu.vector_store %arg9[%c0_11, %c1, %c3], %1 {strides = array<i32>} : memref<8x34x9xf32, #tpu.memory_space<vmem>>, vector<8x32x3xf32>,
    %c0_i32 = arith.constant 0 : i32
    %9 = arith.cmpi eq, %arg1, %c0_i32 : i32
    %10 = vector.shape_cast %2 : vector<1x1x3xf32> to vector<1x1x3xf32>
    %11 = vector.broadcast %10 : vector<1x1x3xf32> to vector<1x32x3xf32>
    %c0_12 = arith.constant 0 : index
    %c0_13 = arith.constant 0 : index
    %c0_14 = arith.constant 0 : index
    %c0_15 = arith.constant 0 : index
    %12 = vector.load %arg3[%c0_12, %c0_13, %c0_14, %c0_15] : memref<1x1x32x3xf32, #tpu.memory_space<vmem>>, vector<1x1x32x3xf32>
    %13 = vector.shape_cast %12 : vector<1x1x32x3xf32> to vector<1x32x3xf32>
    %14 = arith.select %9, %11, %13 : vector<1x32x3xf32>
    %c0_16 = arith.constant 0 : index
    %c1_17 = arith.constant 1 : index
    %c0_18 = arith.constant 0 : index
    %15 = vector.load %arg9[%c0_16, %c1_17, %c0_18] : memref<8x34x9xf32, #tpu.memory_space<vmem>>, vector<1x32x3xf32>
    tpu.vector_store %arg9[%c0_16, %c1_17, %c0_18], %14 {strides = array<i32>} : memref<8x34x9xf32, #tpu.memory_space<vmem>>, vector<1x32x3xf32>,
    %16 = vector.extract_strided_slice %1 {offsets = [0, 0, 0], sizes = [7, 32, 3], strides = [1, 1, 1]} : vector<8x32x3xf32> to vector<7x32x3xf32>
    %c1_19 = arith.constant 1 : index
    %c1_20 = arith.constant 1 : index
    %c0_21 = arith.constant 0 : index
    %17 = vector.load %arg9[%c1_19, %c1_20, %c0_21] : memref<8x34x9xf32, #tpu.memory_space<vmem>>, vector<7x32x3xf32>
    tpu.vector_store %arg9[%c1_19, %c1_20, %c0_21], %16 {strides = array<i32>} : memref<8x34x9xf32, #tpu.memory_space<vmem>>, vector<7x32x3xf32>,
    %18 = vector.extract_strided_slice %1 {offsets = [1, 0, 0], sizes = [7, 32, 3], strides = [1, 1, 1]} : vector<8x32x3xf32> to vector<7x32x3xf32>
    %c0_22 = arith.constant 0 : index
    %c1_23 = arith.constant 1 : index
    %c6 = arith.constant 6 : index
    %19 = vector.load %arg9[%c0_22, %c1_23, %c6] : memref<8x34x9xf32, #tpu.memory_space<vmem>>, vector<7x32x3xf32>
    tpu.vector_store %arg9[%c0_22, %c1_23, %c6], %18 {strides = array<i32>} : memref<8x34x9xf32, #tpu.memory_space<vmem>>, vector<7x32x3xf32>,
    %c3_i32 = arith.constant 3 : i32
    %20 = arith.cmpi eq, %arg1, %c3_i32 : i32
    %21 = vector.shape_cast %2 : vector<1x1x3xf32> to vector<1x1x3xf32>
    %22 = vector.broadcast %21 : vector<1x1x3xf32> to vector<1x32x3xf32>
    %c0_24 = arith.constant 0 : index
    %c0_25 = arith.constant 0 : index
    %c0_26 = arith.constant 0 : index
    %c0_27 = arith.constant 0 : index
    %23 = vector.load %arg4[%c0_24, %c0_25, %c0_26, %c0_27] : memref<1x1x32x3xf32, #tpu.memory_space<vmem>>, vector<1x1x32x3xf32>
    %24 = vector.shape_cast %23 : vector<1x1x32x3xf32> to vector<1x32x3xf32>
    %25 = arith.select %20, %22, %24 : vector<1x32x3xf32>
    %c7 = arith.constant 7 : index
    %c1_28 = arith.constant 1 : index
    %c6_29 = arith.constant 6 : index
    %26 = vector.load %arg9[%c7, %c1_28, %c6_29] : memref<8x34x9xf32, #tpu.memory_space<vmem>>, vector<1x32x3xf32>
    tpu.vector_store %arg9[%c7, %c1_28, %c6_29], %25 {strides = array<i32>} : memref<8x34x9xf32, #tpu.memory_space<vmem>>, vector<1x32x3xf32>,
    %c0_30 = arith.constant 0 : index
    %c0_31 = arith.constant 0 : index
    %c0_32 = arith.constant 0 : index
    %27 = vector.load %arg9[%c0_30, %c0_31, %c0_32] : memref<8x34x9xf32, #tpu.memory_space<vmem>>, vector<8x32x9xf32>
    %28 = vector.shape_cast %27 : vector<8x32x9xf32> to vector<256x9xf32>
    %c0_33 = arith.constant 0 : index
    %c0_34 = arith.constant 0 : index
    %c0_35 = arith.constant 0 : index
    %29 = vector.load %arg5[%c0_33, %c0_34, %c0_35] : memref<3x9x64xf32, #tpu.memory_space<vmem>>, vector<1x9x64xf32>
    %30 = vector.shape_cast %29 : vector<1x9x64xf32> to vector<9x64xf32>
    %cst = arith.constant dense<0.000000e+00> : vector<256x64xf32>
    %31 = tpu.matmul %28, %30, %cst {dimension_numbers = #tpu.dot_dimension_numbers<[1], [0], [0], [1], [0, 0, 1, 1], [], []>} : vector<256x9xf32>, vector<9x64xf32>, vector<256x64xf32> -> vector<256x64xf32>
    %c0_36 = arith.constant 0 : index
    %c0_37 = arith.constant 0 : index
    %32 = vector.load %arg10[%c0_36, %c0_37] : memref<256x64xf32, #tpu.memory_space<vmem>>, vector<256x64xf32>
    tpu.vector_store %arg10[%c0_36, %c0_37], %31 {strides = array<i32>} : memref<256x64xf32, #tpu.memory_space<vmem>>, vector<256x64xf32>,
    %c0_38 = arith.constant 0 : index
    %c0_39 = arith.constant 0 : index
    %33 = vector.load %arg10[%c0_38, %c0_39] : memref<256x64xf32, #tpu.memory_space<vmem>>, vector<256x64xf32>
    %c0_40 = arith.constant 0 : index
    %c1_41 = arith.constant 1 : index
    %c0_42 = arith.constant 0 : index
    %34 = vector.load %arg9[%c0_40, %c1_41, %c0_42] : memref<8x34x9xf32, #tpu.memory_space<vmem>>, vector<8x32x9xf32>
    %35 = vector.shape_cast %34 : vector<8x32x9xf32> to vector<256x9xf32>
    %c1_43 = arith.constant 1 : index
    %c0_44 = arith.constant 0 : index
    %c0_45 = arith.constant 0 : index
    %36 = vector.load %arg5[%c1_43, %c0_44, %c0_45] : memref<3x9x64xf32, #tpu.memory_space<vmem>>, vector<1x9x64xf32>
    %37 = vector.shape_cast %36 : vector<1x9x64xf32> to vector<9x64xf32>
    %cst_46 = arith.constant dense<0.000000e+00> : vector<256x64xf32>
    %38 = tpu.matmul %35, %37, %cst_46 {dimension_numbers = #tpu.dot_dimension_numbers<[1], [0], [0], [1], [0, 0, 1, 1], [], []>} : vector<256x9xf32>, vector<9x64xf32>, vector<256x64xf32> -> vector<256x64xf32>
    %39 = arith.addf %33, %38 : vector<256x64xf32>
    %c0_47 = arith.constant 0 : index
    %c0_48 = arith.constant 0 : index
    %40 = vector.load %arg10[%c0_47, %c0_48] : memref<256x64xf32, #tpu.memory_space<vmem>>, vector<256x64xf32>
    tpu.vector_store %arg10[%c0_47, %c0_48], %39 {strides = array<i32>} : memref<256x64xf32, #tpu.memory_space<vmem>>, vector<256x64xf32>,
    %c0_49 = arith.constant 0 : index
    %c0_50 = arith.constant 0 : index
    %41 = vector.load %arg10[%c0_49, %c0_50] : memref<256x64xf32, #tpu.memory_space<vmem>>, vector<256x64xf32>
    %c0_51 = arith.constant 0 : index
    %c2 = arith.constant 2 : index
    %c0_52 = arith.constant 0 : index
    %42 = vector.load %arg9[%c0_51, %c2, %c0_52] : memref<8x34x9xf32, #tpu.memory_space<vmem>>, vector<8x32x9xf32>
    %43 = vector.shape_cast %42 : vector<8x32x9xf32> to vector<256x9xf32>
    %c2_53 = arith.constant 2 : index
    %c0_54 = arith.constant 0 : index
    %c0_55 = arith.constant 0 : index
    %44 = vector.load %arg5[%c2_53, %c0_54, %c0_55] : memref<3x9x64xf32, #tpu.memory_space<vmem>>, vector<1x9x64xf32>
    %45 = vector.shape_cast %44 : vector<1x9x64xf32> to vector<9x64xf32>
    %cst_56 = arith.constant dense<0.000000e+00> : vector<256x64xf32>
    %46 = tpu.matmul %43, %45, %cst_56 {dimension_numbers = #tpu.dot_dimension_numbers<[1], [0], [0], [1], [0, 0, 1, 1], [], []>} : vector<256x9xf32>, vector<9x64xf32>, vector<256x64xf32> -> vector<256x64xf32>
    %47 = arith.addf %41, %46 : vector<256x64xf32>
    %c0_57 = arith.constant 0 : index
    %c0_58 = arith.constant 0 : index
    %48 = vector.load %arg10[%c0_57, %c0_58] : memref<256x64xf32, #tpu.memory_space<vmem>>, vector<256x64xf32>
    tpu.vector_store %arg10[%c0_57, %c0_58], %47 {strides = array<i32>} : memref<256x64xf32, #tpu.memory_space<vmem>>, vector<256x64xf32>,
    %c0_59 = arith.constant 0 : index
    %c0_60 = arith.constant 0 : index
    %49 = vector.load %arg10[%c0_59, %c0_60] : memref<256x64xf32, #tpu.memory_space<vmem>>, vector<256x64xf32>
    %c0_61 = arith.constant 0 : index
    %c0_62 = arith.constant 0 : index
    %50 = vector.load %arg6[%c0_61, %c0_62] : memref<1x64xf32, #tpu.memory_space<vmem>>, vector<1x64xf32>
    %51 = vector.broadcast %50 : vector<1x64xf32> to vector<256x64xf32>
    %52 = arith.addf %49, %51 : vector<256x64xf32>
    %cst_63 = arith.constant 0.000000e+00 : f32
    %53 = vector.broadcast %cst_63 : f32 to vector<256x64xf32>
    %54 = arith.maximumf %52, %53 : vector<256x64xf32>
    %55 = vector.shape_cast %54 : vector<256x64xf32> to vector<1x8x32x64xf32>
    %56 = arith.truncf %55 : vector<1x8x32x64xf32> to vector<1x8x32x64xbf16>
    %c0_64 = arith.constant 0 : index
    %c0_65 = arith.constant 0 : index
    %c0_66 = arith.constant 0 : index
    %c0_67 = arith.constant 0 : index
    %57 = vector.load %arg8[%c0_64, %c0_65, %c0_66, %c0_67] : memref<1x8x32x64xbf16, #tpu.memory_space<vmem>>, vector<1x8x32x64xbf16>
    tpu.vector_store %arg8[%c0_64, %c0_65, %c0_66, %c0_67], %56 {strides = array<i32>} : memref<1x8x32x64xbf16, #tpu.memory_space<vmem>>, vector<1x8x32x64xbf16>,
    return
  }
  func.func @transform_0(%arg0: i32, %arg1: i32) -> (i32, i32, i32, i32) {
    %c0_i32 = arith.constant 0 : i32
    %c0_i32_0 = arith.constant 0 : i32
    %c0_i32_1 = arith.constant 0 : i32
    return %arg0, %arg1, %c0_i32, %c0_i32_0 : i32, i32, i32, i32
  }
  func.func @transform_1(%arg0: i32, %arg1: i32) -> (i32, i32, i32, i32) {
    %c8_i32 = arith.constant 8 : i32
    %0 = arith.muli %arg1, %c8_i32 : i32
    %c1_i32 = arith.constant 1 : i32
    %1 = arith.subi %0, %c1_i32 : i32
    %c0_i32 = arith.constant 0 : i32
    %2 = arith.maxsi %1, %c0_i32 : i32
    %c0_i32_0 = arith.constant 0 : i32
    %c0_i32_1 = arith.constant 0 : i32
    %c0_i32_2 = arith.constant 0 : i32
    return %arg0, %2, %c0_i32_0, %c0_i32_1 : i32, i32, i32, i32
  }
  func.func @transform_2(%arg0: i32, %arg1: i32) -> (i32, i32, i32, i32) {
    %c8_i32 = arith.constant 8 : i32
    %0 = arith.muli %arg1, %c8_i32 : i32
    %c8_i32_0 = arith.constant 8 : i32
    %1 = arith.addi %0, %c8_i32_0 : i32
    %c31_i32 = arith.constant 31 : i32
    %2 = arith.minsi %1, %c31_i32 : i32
    %c0_i32 = arith.constant 0 : i32
    %c0_i32_1 = arith.constant 0 : i32
    %c0_i32_2 = arith.constant 0 : i32
    return %arg0, %2, %c0_i32, %c0_i32_1 : i32, i32, i32, i32
  }
  func.func @transform_3(%arg0: i32, %arg1: i32) -> (i32, i32, i32) {
    %c0_i32 = arith.constant 0 : i32
    %c0_i32_0 = arith.constant 0 : i32
    %c0_i32_1 = arith.constant 0 : i32
    %c0_i32_2 = arith.constant 0 : i32
    return %c0_i32, %c0_i32_0, %c0_i32_1 : i32, i32, i32
  }
  func.func @transform_4(%arg0: i32, %arg1: i32) -> (i32, i32) {
    %c0_i32 = arith.constant 0 : i32
    %c0_i32_0 = arith.constant 0 : i32
    %c0_i32_1 = arith.constant 0 : i32
    return %c0_i32, %c0_i32_0 : i32, i32
  }
  func.func @transform_5(%arg0: i32, %arg1: i32) -> (i32, i32, i32) {
    %c0_i32 = arith.constant 0 : i32
    %c0_i32_0 = arith.constant 0 : i32
    %c0_i32_1 = arith.constant 0 : i32
    %c0_i32_2 = arith.constant 0 : i32
    return %c0_i32, %c0_i32_0, %c0_i32_1 : i32, i32, i32
  }
  func.func @transform_6(%arg0: i32, %arg1: i32) -> (i32, i32, i32, i32) {
    %c0_i32 = arith.constant 0 : i32
    %c0_i32_0 = arith.constant 0 : i32
    %c0_i32_1 = arith.constant 0 : i32
    return %arg0, %arg1, %c0_i32, %c0_i32_0 : i32, i32, i32, i32
  }
}

</mosaic_0001>

<llo_original>
// kernel: tpu_custom_call.1
$region0: #{tpu_custom_call.1}
  #allocation0 [shape = 'u32[]', space=smem, size = 0x4, offset = 0x4, fixed_abs, tag = 'smem constant byte address 0x4 - core index']
  #allocation1 [shape = 'u32[144,128]{1,0:T(1,128)}', space=vmem, size = 0x12000, scoped, tag = 'internal scratch']
  #allocation2 [shape = 'f32[8,34,9]{2,1,0:T(8,128)}', space=vmem, size = 0x28000, scoped, tag = 'scratch operand']
  #allocation3 [shape = 'f32[256,64]{1,0:T(8,128)}', space=vmem, size = 0x20000, scoped, tag = 'scratch operand']
  %s0 = inlined_call_operand.vmem [shape: f32[2,32,32,3], index: 0, kind: input, shape index: {}]
  %s1 = inlined_call_operand.vmem [shape: f32[2,32,32,3], index: 1, kind: input, shape index: {}]
  %s2 = inlined_call_operand.vmem [shape: f32[2,32,32,3], index: 2, kind: input, shape index: {}]
  %s3 = inlined_call_operand.vmem [shape: f32[3,9,64], index: 3, kind: input, shape index: {}]
  %s4 = inlined_call_operand.vmem [shape: f32[1,64], index: 4, kind: input, shape index: {}]
  %s5 = inlined_call_operand.vmem [shape: f32[1,1,3], index: 5, kind: input, shape index: {}]
  %s6 = inlined_call_operand.hbm [shape: bf16[2,32,32,64], index: 6, kind: output, shape index: {}]
  %s7 = sld [smem:[#allocation0]]
  $region57: #{tpu_custom_call.1} parent=0
    _
  %s9 = ssub.s32 1, %s7
  %s10 = scalar_select 0, %s9, %s7
  $region1: #{tpu_custom_call.1} parent=0
    #allocation4 [shape = 'u8[131072]{0}', space=vmem, size = 0x20000, scoped, tag = 'output window, operand 0']
    #allocation5 [shape = 's32[2]{0}', space=sflag, size = 0x8, scoped, tag = 'scoped memory for tpu_custom_call.1']
    %11 = vsyncpa [#allocation5], 0
    %s12 = scalar_lea.sflag [#allocation5], 1
    %13 = vsyncpa %s12, 0
    loop: start=0, step=1, limit=10
    $region2: #{tpu_custom_call.1} parent=1 // loop_pre_header
      _
    $region3: #{tpu_custom_call.1} parent=1 // loop_header
      %s15 = sphi 0, %s19
      %p16 = scmp.ge.s32.totalorder %s15, 10
      %s22 = sphi 0, %s34
      %s23 = sphi 0, %s30
      %s24 = sphi 0, %s22
      %s25 = sphi 0, %s23
      %s26 = sphi 0, %s24
      %s27 = sphi 0, %s25
      %s39 = sphi 0, %s41
      %s42 = sphi 0, %s39
      %s43 = sphi 0, %s42
      %s59 = sphi 0, %s43
      %s75 = sphi 0, %s77
      %s78 = sphi 0, %s75
      %s79 = sphi 0, %s78
      %s95 = sphi 0, %s79
      %s111 = sphi 0, %s113
      %s114 = sphi 0, %s111
      %s115 = sphi 0, %s114
      %s131 = sphi 0, %s115
      %s135 = sphi 0, %s135
      %s137 = sphi 0, %s135
      %s138 = sphi 0, %s137
      %s152 = sphi 0, %s138
      %s156 = sphi 0, %s156
      %s158 = sphi 0, %s156
      %s159 = sphi 0, %s158
      %s173 = sphi 0, %s159
      %s177 = sphi 0, %s177
      %s179 = sphi 0, %s177
      %s180 = sphi 0, %s179
      %s194 = sphi 0, %s180
      %s202 = sphi 0, %s204
      %s205 = sphi 0, %s202
      %s206 = sphi 0, %s205
      %s222 = sphi 0, %s206
    $region4: #{tpu_custom_call.1} parent=1 // loop_header_branch
      %18 = sbr.rel (%p16) target = $region8
    $region5: #{tpu_custom_call.1} parent=1 // loop_body
      %s20 = ssub.s32 %s15, 1
      %s21 = ssub.s32 %s15, 2
      %s28 = sadd.s32 1, %s23
      %p29 = scmp.ge.s32.totalorder %s28, 4
      %s30 = scalar_select %p29, 0, %s28
      %s31 = sadd.s32 1, %s22
      %s32 = scalar_select %p29, %s31, %s22
      %p33 = scmp.ge.s32.totalorder %s32, 2
      %s34 = scalar_select %p33, 0, %s32
      %s35 = ssub.s32 %s22, %s34
      %s36 = ssub.s32 %s23, %s30
      %s37 = sor.u32 %s35, %s36
      %p38 = scmp.eq.s32.totalorder %s37, 0
      %s40 = sadd.s32 %s39, 1
      %s41 = scalar_select %p38, %s39, %s40
      %p44 = pneg %p38
      %p45 = scmp.eq.s32.totalorder %s15, 7
      %p46 = por %p44, %p45
      %p47 = scmp.ne.s32.totalorder %s39, %s42
      %p48 = scmp.eq.s32.totalorder %s15, 0
      %p49 = por %p47, %p48
      %p50 = scmp.ne.s32.totalorder %s39, %s42
      %p51 = scmp.eq.s32.totalorder %s20, 7
      %p52 = por %p50, %p51
      %p53 = scmp.ne.s32.totalorder %s42, %s43
      %p54 = scmp.eq.s32.totalorder %s20, 0
      %p55 = por %p53, %p54
      %p56 = scmp.ne.s32.totalorder %s42, %s43
      %p57 = scmp.eq.s32.totalorder %s21, 7
      %p58 = por %p56, %p57
      %p60 = scmp.ne.s32.totalorder %s43, %s59
      %p61 = scmp.eq.s32.totalorder %s21, 0
      %p62 = por %p60, %p61
      %s63 = smul.u32 %s23, 8
      %s64 = ssub.s32 %s63, 1
      %p65 = scmp.gt.s32.totalorder %s64, 0
      %s66 = scalar_select %p65, %s64, 0
      %s67 = smul.u32 %s30, 8
      %s68 = ssub.s32 %s67, 1
      %p69 = scmp.gt.s32.totalorder %s68, 0
      %s70 = scalar_select %p69, %s68, 0
      %s71 = ssub.s32 %s22, %s34
      %s72 = ssub.s32 %s66, %s70
      %s73 = sor.u32 %s71, %s72
      %p74 = scmp.eq.s32.totalorder %s73, 0
      %s76 = sadd.s32 %s75, 1
      %s77 = scalar_select %p74, %s75, %s76
      %p80 = pneg %p74
      %p81 = scmp.eq.s32.totalorder %s15, 7
      %p82 = por %p80, %p81
      %p83 = scmp.ne.s32.totalorder %s75, %s78
      %p84 = scmp.eq.s32.totalorder %s15, 0
      %p85 = por %p83, %p84
      %p86 = scmp.ne.s32.totalorder %s75, %s78
      %p87 = scmp.eq.s32.totalorder %s20, 7
      %p88 = por %p86, %p87
      %p89 = scmp.ne.s32.totalorder %s78, %s79
      %p90 = scmp.eq.s32.totalorder %s20, 0
      %p91 = por %p89, %p90
      %p92 = scmp.ne.s32.totalorder %s78, %s79
      %p93 = scmp.eq.s32.totalorder %s21, 7
      %p94 = por %p92, %p93
      %p96 = scmp.ne.s32.totalorder %s79, %s95
      %p97 = scmp.eq.s32.totalorder %s21, 0
      %p98 = por %p96, %p97
      %s99 = smul.u32 %s23, 8
      %s100 = sadd.s32 %s99, 8
      %p101 = scmp.lt.s32.totalorder %s100, 31
      %s102 = scalar_select %p101, %s100, 31
      %s103 = smul.u32 %s30, 8
      %s104 = sadd.s32 %s103, 8
      %p105 = scmp.lt.s32.totalorder %s104, 31
      %s106 = scalar_select %p105, %s104, 31
      %s107 = ssub.s32 %s22, %s34
      %s108 = ssub.s32 %s102, %s106
      %s109 = sor.u32 %s107, %s108
      %p110 = scmp.eq.s32.totalorder %s109, 0
      %s112 = sadd.s32 %s111, 1
      %s113 = scalar_select %p110, %s111, %s112
      %p116 = pneg %p110
      %p117 = scmp.eq.s32.totalorder %s15, 7
      %p118 = por %p116, %p117
      %p119 = scmp.ne.s32.totalorder %s111, %s114
      %p120 = scmp.eq.s32.totalorder %s15, 0
      %p121 = por %p119, %p120
      %p122 = scmp.ne.s32.totalorder %s111, %s114
      %p123 = scmp.eq.s32.totalorder %s20, 7
      %p124 = por %p122, %p123
      %p125 = scmp.ne.s32.totalorder %s114, %s115
      %p126 = scmp.eq.s32.totalorder %s20, 0
      %p127 = por %p125, %p126
      %p128 = scmp.ne.s32.totalorder %s114, %s115
      %p129 = scmp.eq.s32.totalorder %s21, 7
      %p130 = por %p128, %p129
      %p132 = scmp.ne.s32.totalorder %s115, %s131
      %p133 = scmp.eq.s32.totalorder %s21, 0
      %p134 = por %p132, %p133
      %s136 = sadd.s32 %s135, 1
      %p139 = scmp.eq.s32.totalorder %s15, 7
      %p140 = scmp.ne.s32.totalorder %s135, %s137
      %p141 = scmp.eq.s32.totalorder %s15, 0
      %p142 = por %p140, %p141
      %p143 = scmp.ne.s32.totalorder %s135, %s137
      %p144 = scmp.eq.s32.totalorder %s20, 7
      %p145 = por %p143, %p144
      %p146 = scmp.ne.s32.totalorder %s137, %s138
      %p147 = scmp.eq.s32.totalorder %s20, 0
      %p148 = por %p146, %p147
      %p149 = scmp.ne.s32.totalorder %s137, %s138
      %p150 = scmp.eq.s32.totalorder %s21, 7
      %p151 = por %p149, %p150
      %p153 = scmp.ne.s32.totalorder %s138, %s152
      %p154 = scmp.eq.s32.totalorder %s21, 0
      %p155 = por %p153, %p154
      %s157 = sadd.s32 %s156, 1
      %p160 = scmp.eq.s32.totalorder %s15, 7
      %p161 = scmp.ne.s32.totalorder %s156, %s158
      %p162 = scmp.eq.s32.totalorder %s15, 0
      %p163 = por %p161, %p162
      %p164 = scmp.ne.s32.totalorder %s156, %s158
      %p165 = scmp.eq.s32.totalorder %s20, 7
      %p166 = por %p164, %p165
      %p167 = scmp.ne.s32.totalorder %s158, %s159
      %p168 = scmp.eq.s32.totalorder %s20, 0
      %p169 = por %p167, %p168
      %p170 = scmp.ne.s32.totalorder %s158, %s159
      %p171 = scmp.eq.s32.totalorder %s21, 7
      %p172 = por %p170, %p171
      %p174 = scmp.ne.s32.totalorder %s159, %s173
      %p175 = scmp.eq.s32.totalorder %s21, 0
      %p176 = por %p174, %p175
      %s178 = sadd.s32 %s177, 1
      %p181 = scmp.eq.s32.totalorder %s15, 7
      %p182 = scmp.ne.s32.totalorder %s177, %s179
      %p183 = scmp.eq.s32.totalorder %s15, 0
      %p184 = por %p182, %p183
      %p185 = scmp.ne.s32.totalorder %s177, %s179
      %p186 = scmp.eq.s32.totalorder %s20, 7
      %p187 = por %p185, %p186
      %p188 = scmp.ne.s32.totalorder %s179, %s180
      %p189 = scmp.eq.s32.totalorder %s20, 0
      %p190 = por %p188, %p189
      %p191 = scmp.ne.s32.totalorder %s179, %s180
      %p192 = scmp.eq.s32.totalorder %s21, 7
      %p193 = por %p191, %p192
      %p195 = scmp.ne.s32.totalorder %s180, %s194
      %p196 = scmp.eq.s32.totalorder %s21, 0
      %p197 = por %p195, %p196
      %s198 = ssub.s32 %s22, %s34
      %s199 = ssub.s32 %s23, %s30
      %s200 = sor.u32 %s198, %s199
      %p201 = scmp.eq.s32.totalorder %s200, 0
      %s203 = sadd.s32 %s202, 1
      %s204 = scalar_select %p201, %s202, %s203
      %p207 = pneg %p201
      %p208 = scmp.eq.s32.totalorder %s15, 7
      %p209 = por %p207, %p208
      %p210 = scmp.ne.s32.totalorder %s202, %s205
      %p211 = scmp.eq.s32.totalorder %s15, 0
      %p212 = por %p210, %p211
      %p213 = scmp.ne.s32.totalorder %s202, %s205
      %p214 = scmp.eq.s32.totalorder %s20, 7
      %p215 = por %p213, %p214
      %p216 = scmp.ne.s32.totalorder %s205, %s206
      %p217 = scmp.eq.s32.totalorder %s20, 0
      %p218 = por %p216, %p217
      %p219 = scmp.ne.s32.totalorder %s205, %s206
      %p220 = scmp.eq.s32.totalorder %s21, 7
      %p221 = por %p219, %p220
      %p223 = scmp.ne.s32.totalorder %s206, %s222
      %p224 = scmp.eq.s32.totalorder %s21, 0
      %p225 = por %p223, %p224
      %p226 = scmp.le.s32.totalorder 1, %s15
      %p227 = scmp.lt.s32.totalorder %s15, 9
      %p228 = pnand %p226, %p227
      %p229 = pneg %p228
      // Predicated region
      $region9: #{tpu_custom_call.1} parent=5 // pred_check
        _
      $region10: #{tpu_custom_call.1} parent=5 // pred_check_branch
        %231 = sbr.rel (%p228) target = $region12
      $region11: #{tpu_custom_call.1} parent=5 // pred_region
        %s232 = ssub.s32 %s15, 1
        // Predicated region
        $region13: #{tpu_custom_call.1} parent=11 // pred_check
          %p233 = pneg %p148
        $region14: #{tpu_custom_call.1} parent=11 // pred_check_branch
          %235 = sbr.rel (%p233) target = $region16
        $region15: #{tpu_custom_call.1} parent=11 // pred_region
          _
        $region16: #{tpu_custom_call.1} parent=11 // pred_fallthru
          _
        // Predicated region
        $region17: #{tpu_custom_call.1} parent=11 // pred_check
          %p236 = pneg %p169
        $region18: #{tpu_custom_call.1} parent=11 // pred_check_branch
          %238 = sbr.rel (%p236) target = $region20
        $region19: #{tpu_custom_call.1} parent=11 // pred_region
          _
        $region20: #{tpu_custom_call.1} parent=11 // pred_fallthru
          _
        // Predicated region
        $region21: #{tpu_custom_call.1} parent=11 // pred_check
          %p239 = pneg %p190
        $region22: #{tpu_custom_call.1} parent=11 // pred_check_branch
          %241 = sbr.rel (%p239) target = $region24
        $region23: #{tpu_custom_call.1} parent=11 // pred_region
          _
        $region24: #{tpu_custom_call.1} parent=11 // pred_fallthru
          _
      $region12: #{tpu_custom_call.1} parent=5 // pred_fallthru
        _
      %p242 = scmp.lt.s32.totalorder %s15, 8
      // Predicated region
      $region25: #{tpu_custom_call.1} parent=5 // pred_check
        %p243 = pneg %p242
      $region26: #{tpu_custom_call.1} parent=5 // pred_check_branch
        %245 = sbr.rel (%p243) target = $region28
      $region27: #{tpu_custom_call.1} parent=5 // pred_region
        // Predicated region
        $region29: #{tpu_custom_call.1} parent=27 // pred_check
          %p246 = pneg %p49
        $region30: #{tpu_custom_call.1} parent=27 // pred_check_branch
          %248 = sbr.rel (%p246) target = $region32
        $region31: #{tpu_custom_call.1} parent=27 // pred_region
          %s249 = smul.u32 8, %s23
          %p250 = scmp.lt.s32.totalorder %s22, 1
          %s251 = scalar_select %p250, %s22, 1
          %p252 = scmp.lt.s32.totalorder %s249, 31
          %s253 = scalar_select %p252, %s249, 31
          %s254 = smul.addr %s253, 4
          %s255 = smul.addr %s251, 128
          %s256 = sadd.s32 %s254, %s255
          %s257 = smul.addr %s256, 8
          %s258 = scalar_lea.vmem %s0, %s257
          %s259 = smul.u32 8, %s23
        $region32: #{tpu_custom_call.1} parent=27 // pred_fallthru
          _
        // Predicated region
        $region33: #{tpu_custom_call.1} parent=27 // pred_check
          %p260 = pneg %p85
        $region34: #{tpu_custom_call.1} parent=27 // pred_check_branch
          %262 = sbr.rel (%p260) target = $region36
        $region35: #{tpu_custom_call.1} parent=27 // pred_region
          %s263 = smul.u32 %s23, 8
          %s264 = ssub.s32 %s263, 1
          %p265 = scmp.gt.s32.totalorder %s264, 0
          %s266 = scalar_select %p265, %s264, 0
          %p267 = scmp.lt.s32.totalorder %s22, 1
          %s268 = scalar_select %p267, %s22, 1
          %p269 = scmp.lt.s32.totalorder %s266, 31
          %s270 = scalar_select %p269, %s266, 31
          %s271 = smul.addr %s270, 4
          %s272 = smul.addr %s268, 128
          %s273 = sadd.s32 %s271, %s272
          %s274 = smul.addr %s273, 8
          %s275 = scalar_lea.vmem %s1, %s274
          %s276 = smul.u32 %s23, 8
          %s277 = ssub.s32 %s276, 1
          %p278 = scmp.gt.s32.totalorder %s277, 0
          %s279 = scalar_select %p278, %s277, 0
        $region36: #{tpu_custom_call.1} parent=27 // pred_fallthru
          _
        // Predicated region
        $region37: #{tpu_custom_call.1} parent=27 // pred_check
          %p280 = pneg %p121
        $region38: #{tpu_custom_call.1} parent=27 // pred_check_branch
          %282 = sbr.rel (%p280) target = $region40
        $region39: #{tpu_custom_call.1} parent=27 // pred_region
          %s283 = smul.u32 %s23, 8
          %s284 = sadd.s32 %s283, 8
          %p285 = scmp.lt.s32.totalorder %s284, 31
          %s286 = scalar_select %p285, %s284, 31
          %p287 = scmp.lt.s32.totalorder %s22, 1
          %s288 = scalar_select %p287, %s22, 1
          %p289 = scmp.lt.s32.totalorder %s286, 31
          %s290 = scalar_select %p289, %s286, 31
          %s291 = smul.addr %s290, 4
          %s292 = smul.addr %s288, 128
          %s293 = sadd.s32 %s291, %s292
          %s294 = smul.addr %s293, 8
          %s295 = scalar_lea.vmem %s2, %s294
          %s296 = smul.u32 %s23, 8
          %s297 = sadd.s32 %s296, 8
          %p298 = scmp.lt.s32.totalorder %s297, 31
          %s299 = scalar_select %p298, %s297, 31
        $region40: #{tpu_custom_call.1} parent=27 // pred_fallthru
          _
      $region28: #{tpu_custom_call.1} parent=5 // pred_fallthru
        _
      %p300 = scmp.le.s32.totalorder 1, %s15
      %p301 = scmp.lt.s32.totalorder %s15, 9
      %p302 = pnand %p300, %p301
      %p303 = pneg %p302
      // Predicated region
      $region41: #{tpu_custom_call.1} parent=5 // pred_check
        _
      $region42: #{tpu_custom_call.1} parent=5 // pred_check_branch
        %305 = sbr.rel (%p302) target = $region44
      $region43: #{tpu_custom_call.1} parent=5 // pred_region
        %s306 = ssub.s32 %s15, 1
        %s307 = smul.u32 8, %s25
        %p308 = scmp.lt.s32.totalorder %s24, 1
        %s309 = scalar_select %p308, %s24, 1
        %p310 = scmp.lt.s32.totalorder %s307, 31
        %s311 = scalar_select %p310, %s307, 31
        %s312 = smul.addr %s311, 4
        %s313 = smul.addr %s309, 128
        %s314 = sadd.s32 %s312, %s313
        %s315 = smul.addr %s314, 8
        %s316 = scalar_lea.vmem %s0, %s315
        %p317 = pneg %p55
        %p318 = pneg %p52
        %s319 = smul.u32 %s25, 8
        %s320 = ssub.s32 %s319, 1
        %p321 = scmp.gt.s32.totalorder %s320, 0
        %s322 = scalar_select %p321, %s320, 0
        %p323 = scmp.lt.s32.totalorder %s24, 1
        %s324 = scalar_select %p323, %s24, 1
        %p325 = scmp.lt.s32.totalorder %s322, 31
        %s326 = scalar_select %p325, %s322, 31
        %s327 = smul.addr %s326, 4
        %s328 = smul.addr %s324, 128
        %s329 = sadd.s32 %s327, %s328
        %s330 = smul.addr %s329, 8
        %s331 = scalar_lea.vmem %s1, %s330
        %p332 = pneg %p91
        %p333 = pneg %p88
        %s334 = smul.u32 %s25, 8
        %s335 = sadd.s32 %s334, 8
        %p336 = scmp.lt.s32.totalorder %s335, 31
        %s337 = scalar_select %p336, %s335, 31
        %p338 = scmp.lt.s32.totalorder %s24, 1
        %s339 = scalar_select %p338, %s24, 1
        %p340 = scmp.lt.s32.totalorder %s337, 31
        %s341 = scalar_select %p340, %s337, 31
        %s342 = smul.addr %s341, 4
        %s343 = smul.addr %s339, 128
        %s344 = sadd.s32 %s342, %s343
        %s345 = smul.addr %s344, 8
        %s346 = scalar_lea.vmem %s2, %s345
        %p347 = pneg %p127
        %p348 = pneg %p124
        %p349 = pneg %p148
        %p350 = pneg %p145
        %p351 = pneg %p169
        %p352 = pneg %p166
        %p353 = pneg %p190
        %p354 = pneg %p187
        %p355 = pneg %p218
        %p356 = pneg %p215
        %s357 = sand.u32 %s205, 1
        %s358 = scalar_lea.sflag [#allocation5], %s357
        %s359 = sand.u32 %s205, 1
        %s360 = smul.addr %s359, 128
        %s361 = scalar_lea.vmem [#allocation4], %s360
        %s362 = smul.u32 8, %s25
        %p363 = scmp.lt.s32.totalorder %s24, 1
        %s364 = scalar_select %p363, %s24, 1
        %p365 = scmp.lt.s32.totalorder %s362, 31
        %s366 = scalar_select %p365, %s362, 31
        %s367 = smul.addr %s366, 4
        %s368 = smul.addr %s364, 128
        %s369 = sadd.s32 %s367, %s368
        %s370 = smul.addr %s369, 8
        %s371 = scalar_lea.vmem %s0, %s370
        %s372 = smul.u32 8, %s25
        %s373 = smul.u32 %s25, 8
        %s374 = ssub.s32 %s373, 1
        %p375 = scmp.gt.s32.totalorder %s374, 0
        %s376 = scalar_select %p375, %s374, 0
        %p377 = scmp.lt.s32.totalorder %s24, 1
        %s378 = scalar_select %p377, %s24, 1
        %p379 = scmp.lt.s32.totalorder %s376, 31
        %s380 = scalar_select %p379, %s376, 31
        %s381 = smul.addr %s380, 4
        %s382 = smul.addr %s378, 128
        %s383 = sadd.s32 %s381, %s382
        %s384 = smul.addr %s383, 8
        %s385 = scalar_lea.vmem %s1, %s384
        %s386 = smul.u32 %s25, 8
        %s387 = ssub.s32 %s386, 1
        %p388 = scmp.gt.s32.totalorder %s387, 0
        %s389 = scalar_select %p388, %s387, 0
        %s390 = smul.u32 %s25, 8
        %s391 = sadd.s32 %s390, 8
        %p392 = scmp.lt.s32.totalorder %s391, 31
        %s393 = scalar_select %p392, %s391, 31
        %p394 = scmp.lt.s32.totalorder %s24, 1
        %s395 = scalar_select %p394, %s24, 1
        %p396 = scmp.lt.s32.totalorder %s393, 31
        %s397 = scalar_select %p396, %s393, 31
        %s398 = smul.addr %s397, 4
        %s399 = smul.addr %s395, 128
        %s400 = sadd.s32 %s398, %s399
        %s401 = smul.addr %s400, 8
        %s402 = scalar_lea.vmem %s2, %s401
        %s403 = smul.u32 %s25, 8
        %s404 = sadd.s32 %s403, 8
        %p405 = scmp.lt.s32.totalorder %s404, 31
        %s406 = scalar_select %p405, %s404, 31
        %s407 = smul.u32 8, %s25
        %v408 = vld [vmem:[%s371] sm:$0xff]
        %v409 = vld [vmem:[%s371 + $0x8] sm:$0xff]
        %v410 = vld [vmem:[%s371 + $0x10] sm:$0xff]
        %v411 = vld [vmem:[%s371 + $0x18] sm:$0xff]
        %v412 = vld [vmem:[%s371 + $0x20] sm:$0xff]
        %v413 = vld [vmem:[%s371 + $0x28] sm:$0xff]
        %v414 = vld [vmem:[%s371 + $0x30] sm:$0xff]
        %v415 = vld [vmem:[%s371 + $0x38] sm:$0xff]
        %v416 = vld [vmem:[%s371 + $0x40] sm:$0xff]
        %v417 = vld [vmem:[%s371 + $0x48] sm:$0xff]
        %v418 = vld [vmem:[%s371 + $0x50] sm:$0xff]
        %v419 = vld [vmem:[%s371 + $0x58] sm:$0xff]
        %v420 = vld [vmem:[%s371 + $0x60] sm:$0xff]
        %v421 = vld [vmem:[%s371 + $0x68] sm:$0xff]
        %v422 = vld [vmem:[%s371 + $0x70] sm:$0xff]
        %v423 = vld [vmem:[%s371 + $0x78] sm:$0xff]
        %v424 = vld [vmem:[%s371 + $0x80] sm:$0xff]
        %v425 = vld [vmem:[%s371 + $0x88] sm:$0xff]
        %v426 = vld [vmem:[%s371 + $0x90] sm:$0xff]
        %v427 = vld [vmem:[%s371 + $0x98] sm:$0xff]
        %v428 = vld [vmem:[%s371 + $0xa0] sm:$0xff]
        %v429 = vld [vmem:[%s371 + $0xa8] sm:$0xff]
        %v430 = vld [vmem:[%s371 + $0xb0] sm:$0xff]
        %v431 = vld [vmem:[%s371 + $0xb8] sm:$0xff]
        %v432 = vld [vmem:[%s371 + $0xc0] sm:$0xff]
        %v433 = vld [vmem:[%s371 + $0xc8] sm:$0xff]
        %v434 = vld [vmem:[%s371 + $0xd0] sm:$0xff]
        %v435 = vld [vmem:[%s371 + $0xd8] sm:$0xff]
        %v436 = vld [vmem:[%s371 + $0xe0] sm:$0xff]
        %v437 = vld [vmem:[%s371 + $0xe8] sm:$0xff]
        %v438 = vld [vmem:[%s371 + $0xf0] sm:$0xff]
        %v439 = vld [vmem:[%s371 + $0xf8] sm:$0xff]
        %v440 = vld [vmem:[%s5] sm:$0x1]
        %v442 = vlaneseq
        %v443 = vshrl.u32 %v442, 7
        %v444 = vsub.s32 0, %v443
        %v445 = vrot.slane %v440, %v444
        %446 = vrot.lane.b32.xlu0 %v445, 3
        %v447 = vpop.permute.xlu0 %446
        %449 = vrot.lane.b32.xlu0 %v445, 6
        %v450 = vpop.permute.xlu0 %449
        %vm452 = vcmask 23552
        %v453 = vsel %vm452, %v440, %v447
        %vm454 = vcmask 48128
        %v455 = vsel %vm454, %v453, %v450
        %vm456 = vcmask 65536
        %457 = vst.msk [vmem:[#allocation2] sm:$0x1] %vm456, %v455
        %458 = vst.msk [vmem:[#allocation2 + $0x28] sm:$0x1] %vm456, %v455
        %459 = vst.msk [vmem:[#allocation2 + $0x50] sm:$0x1] %vm456, %v455
        %460 = vst.msk [vmem:[#allocation2 + $0x78] sm:$0x1] %vm456, %v455
        %461 = vst.msk [vmem:[#allocation2 + $0xa0] sm:$0x1] %vm456, %v455
        %462 = vst.msk [vmem:[#allocation2 + $0xc8] sm:$0x1] %vm456, %v455
        %463 = vst.msk [vmem:[#allocation2 + $0xf0] sm:$0x1] %vm456, %v455
        %464 = vst.msk [vmem:[#allocation2 + $0x118] sm:$0x1] %vm456, %v455
        %465 = vst.msk [vmem:[#allocation2 + $0x21] sm:$0x1] %vm456, %v455
        %466 = vst.msk [vmem:[#allocation2 + $0x49] sm:$0x1] %vm456, %v455
        %467 = vst.msk [vmem:[#allocation2 + $0x71] sm:$0x1] %vm456, %v455
        %468 = vst.msk [vmem:[#allocation2 + $0x99] sm:$0x1] %vm456, %v455
        %469 = vst.msk [vmem:[#allocation2 + $0xc1] sm:$0x1] %vm456, %v455
        %470 = vst.msk [vmem:[#allocation2 + $0xe9] sm:$0x1] %vm456, %v455
        %471 = vst.msk [vmem:[#allocation2 + $0x111] sm:$0x1] %vm456, %v455
        %472 = vst.msk [vmem:[#allocation2 + $0x139] sm:$0x1] %vm456, %v455
        %505 = vrot.lane.b32.xlu0 %v408, 3
        %v506 = vpop.permute.xlu0 %505
        %507 = vrot.lane.b32.xlu0 %v409, 3
        %v508 = vpop.permute.xlu0 %507
        %509 = vrot.lane.b32.xlu0 %v410, 3
        %v510 = vpop.permute.xlu0 %509
        %511 = vrot.lane.b32.xlu0 %v411, 3
        %v512 = vpop.permute.xlu0 %511
        %513 = vrot.lane.b32.xlu0 %v412, 3
        %v514 = vpop.permute.xlu0 %513
        %515 = vrot.lane.b32.xlu0 %v413, 3
        %v516 = vpop.permute.xlu0 %515
        %517 = vrot.lane.b32.xlu0 %v414, 3
        %v518 = vpop.permute.xlu0 %517
        %519 = vrot.lane.b32.xlu0 %v415, 3
        %v520 = vpop.permute.xlu0 %519
        %521 = vrot.lane.b32.xlu0 %v416, 3
        %v522 = vpop.permute.xlu0 %521
        %523 = vrot.lane.b32.xlu0 %v417, 3
        %v524 = vpop.permute.xlu0 %523
        %525 = vrot.lane.b32.xlu0 %v418, 3
        %v526 = vpop.permute.xlu0 %525
        %527 = vrot.lane.b32.xlu0 %v419, 3
        %v528 = vpop.permute.xlu0 %527
        %529 = vrot.lane.b32.xlu0 %v420, 3
        %v530 = vpop.permute.xlu0 %529
        %531 = vrot.lane.b32.xlu0 %v421, 3
        %v532 = vpop.permute.xlu0 %531
        %533 = vrot.lane.b32.xlu0 %v422, 3
        %v534 = vpop.permute.xlu0 %533
        %535 = vrot.lane.b32.xlu0 %v423, 3
        %v536 = vpop.permute.xlu0 %535
        %537 = vrot.lane.b32.xlu0 %v424, 3
        %v538 = vpop.permute.xlu0 %537
        %539 = vrot.lane.b32.xlu0 %v425, 3
        %v540 = vpop.permute.xlu0 %539
        %541 = vrot.lane.b32.xlu0 %v426, 3
        %v542 = vpop.permute.xlu0 %541
        %543 = vrot.lane.b32.xlu0 %v427, 3
        %v544 = vpop.permute.xlu0 %543
        %545 = vrot.lane.b32.xlu0 %v428, 3
        %v546 = vpop.permute.xlu0 %545
        %547 = vrot.lane.b32.xlu0 %v429, 3
        %v548 = vpop.permute.xlu0 %547
        %549 = vrot.lane.b32.xlu0 %v430, 3
        %v550 = vpop.permute.xlu0 %549
        %551 = vrot.lane.b32.xlu0 %v431, 3
        %v552 = vpop.permute.xlu0 %551
        %553 = vrot.lane.b32.xlu0 %v432, 3
        %v554 = vpop.permute.xlu0 %553
        %555 = vrot.lane.b32.xlu0 %v433, 3
        %v556 = vpop.permute.xlu0 %555
        %557 = vrot.lane.b32.xlu0 %v434, 3
        %v558 = vpop.permute.xlu0 %557
        %559 = vrot.lane.b32.xlu0 %v435, 3
        %v560 = vpop.permute.xlu0 %559
        %561 = vrot.lane.b32.xlu0 %v436, 3
        %v562 = vpop.permute.xlu0 %561
        %563 = vrot.lane.b32.xlu0 %v437, 3
        %v564 = vpop.permute.xlu0 %563
        %565 = vrot.lane.b32.xlu0 %v438, 3
        %v566 = vpop.permute.xlu0 %565
        %567 = vrot.lane.b32.xlu0 %v439, 3
        %v568 = vpop.permute.xlu0 %567
        %vm601 = vcmask 48152
        %602 = vst.msk [vmem:[#allocation2 + $0x1] sm:$0xff] %vm601, %v506
        %603 = vst.msk [vmem:[#allocation2 + $0x9] sm:$0xff] %vm601, %v508
        %604 = vst.msk [vmem:[#allocation2 + $0x11] sm:$0xff] %vm601, %v510
        %605 = vst.msk [vmem:[#allocation2 + $0x19] sm:$0xff] %vm601, %v512
        %606 = vst.msk [vmem:[#allocation2 + $0x29] sm:$0xff] %vm601, %v514
        %607 = vst.msk [vmem:[#allocation2 + $0x31] sm:$0xff] %vm601, %v516
        %608 = vst.msk [vmem:[#allocation2 + $0x39] sm:$0xff] %vm601, %v518
        %609 = vst.msk [vmem:[#allocation2 + $0x41] sm:$0xff] %vm601, %v520
        %610 = vst.msk [vmem:[#allocation2 + $0x51] sm:$0xff] %vm601, %v522
        %611 = vst.msk [vmem:[#allocation2 + $0x59] sm:$0xff] %vm601, %v524
        %612 = vst.msk [vmem:[#allocation2 + $0x61] sm:$0xff] %vm601, %v526
        %613 = vst.msk [vmem:[#allocation2 + $0x69] sm:$0xff] %vm601, %v528
        %614 = vst.msk [vmem:[#allocation2 + $0x79] sm:$0xff] %vm601, %v530
        %615 = vst.msk [vmem:[#allocation2 + $0x81] sm:$0xff] %vm601, %v532
        %616 = vst.msk [vmem:[#allocation2 + $0x89] sm:$0xff] %vm601, %v534
        %617 = vst.msk [vmem:[#allocation2 + $0x91] sm:$0xff] %vm601, %v536
        %618 = vst.msk [vmem:[#allocation2 + $0xa1] sm:$0xff] %vm601, %v538
        %619 = vst.msk [vmem:[#allocation2 + $0xa9] sm:$0xff] %vm601, %v540
        %620 = vst.msk [vmem:[#allocation2 + $0xb1] sm:$0xff] %vm601, %v542
        %621 = vst.msk [vmem:[#allocation2 + $0xb9] sm:$0xff] %vm601, %v544
        %622 = vst.msk [vmem:[#allocation2 + $0xc9] sm:$0xff] %vm601, %v546
        %623 = vst.msk [vmem:[#allocation2 + $0xd1] sm:$0xff] %vm601, %v548
        %624 = vst.msk [vmem:[#allocation2 + $0xd9] sm:$0xff] %vm601, %v550
        %625 = vst.msk [vmem:[#allocation2 + $0xe1] sm:$0xff] %vm601, %v552
        %626 = vst.msk [vmem:[#allocation2 + $0xf1] sm:$0xff] %vm601, %v554
        %627 = vst.msk [vmem:[#allocation2 + $0xf9] sm:$0xff] %vm601, %v556
        %628 = vst.msk [vmem:[#allocation2 + $0x101] sm:$0xff] %vm601, %v558
        %629 = vst.msk [vmem:[#allocation2 + $0x109] sm:$0xff] %vm601, %v560
        %630 = vst.msk [vmem:[#allocation2 + $0x119] sm:$0xff] %vm601, %v562
        %631 = vst.msk [vmem:[#allocation2 + $0x121] sm:$0xff] %vm601, %v564
        %632 = vst.msk [vmem:[#allocation2 + $0x129] sm:$0xff] %vm601, %v566
        %633 = vst.msk [vmem:[#allocation2 + $0x131] sm:$0xff] %vm601, %v568
        %p634 = scmp.eq.s32.totalorder %s25, 0
        %v636 = vld [vmem:[%s385] sm:$0xff]
        %v637 = vld [vmem:[%s385 + $0x8] sm:$0xff]
        %v638 = vld [vmem:[%s385 + $0x10] sm:$0xff]
        %v639 = vld [vmem:[%s385 + $0x18] sm:$0xff]
        %s640 = scalar_select %p634, 1, 0
        %v641 = vstv %s640
        %vm642 = vcmp.eq.s32.totalorder %v641, 1
        %v643 = vsel %vm642, %v445, %v636
        %v644 = vsel %vm642, %v445, %v637
        %v645 = vsel %vm642, %v445, %v638
        %v646 = vsel %vm642, %v445, %v639
        %647 = vst.msk [vmem:[#allocation2 + $0x1] sm:$0xff] %vm452, %v643
        %648 = vst.msk [vmem:[#allocation2 + $0x9] sm:$0xff] %vm452, %v644
        %649 = vst.msk [vmem:[#allocation2 + $0x11] sm:$0xff] %vm452, %v645
        %650 = vst.msk [vmem:[#allocation2 + $0x19] sm:$0xff] %vm452, %v646
        %s651 = scalar_lea.vmem [#allocation2], 40
        %652 = vst.msk [vmem:[%s651 + $0x1] sm:$0xff] %vm452, %v408
        %653 = vst.msk [vmem:[%s651 + $0x9] sm:$0xff] %vm452, %v409
        %654 = vst.msk [vmem:[%s651 + $0x11] sm:$0xff] %vm452, %v410
        %655 = vst.msk [vmem:[%s651 + $0x19] sm:$0xff] %vm452, %v411
        %656 = vst.msk [vmem:[%s651 + $0x29] sm:$0xff] %vm452, %v412
        %657 = vst.msk [vmem:[%s651 + $0x31] sm:$0xff] %vm452, %v413
        %658 = vst.msk [vmem:[%s651 + $0x39] sm:$0xff] %vm452, %v414
        %659 = vst.msk [vmem:[%s651 + $0x41] sm:$0xff] %vm452, %v415
        %660 = vst.msk [vmem:[%s651 + $0x51] sm:$0xff] %vm452, %v416
        %661 = vst.msk [vmem:[%s651 + $0x59] sm:$0xff] %vm452, %v417
        %662 = vst.msk [vmem:[%s651 + $0x61] sm:$0xff] %vm452, %v418
        %663 = vst.msk [vmem:[%s651 + $0x69] sm:$0xff] %vm452, %v419
        %664 = vst.msk [vmem:[%s651 + $0x79] sm:$0xff] %vm452, %v420
        %665 = vst.msk [vmem:[%s651 + $0x81] sm:$0xff] %vm452, %v421
        %666 = vst.msk [vmem:[%s651 + $0x89] sm:$0xff] %vm452, %v422
        %667 = vst.msk [vmem:[%s651 + $0x91] sm:$0xff] %vm452, %v423
        %668 = vst.msk [vmem:[%s651 + $0xa1] sm:$0xff] %vm452, %v424
        %669 = vst.msk [vmem:[%s651 + $0xa9] sm:$0xff] %vm452, %v425
        %670 = vst.msk [vmem:[%s651 + $0xb1] sm:$0xff] %vm452, %v426
        %671 = vst.msk [vmem:[%s651 + $0xb9] sm:$0xff] %vm452, %v427
        %672 = vst.msk [vmem:[%s651 + $0xc9] sm:$0xff] %vm452, %v428
        %673 = vst.msk [vmem:[%s651 + $0xd1] sm:$0xff] %vm452, %v429
        %674 = vst.msk [vmem:[%s651 + $0xd9] sm:$0xff] %vm452, %v430
        %675 = vst.msk [vmem:[%s651 + $0xe1] sm:$0xff] %vm452, %v431
        %676 = vst.msk [vmem:[%s651 + $0xf1] sm:$0xff] %vm452, %v432
        %677 = vst.msk [vmem:[%s651 + $0xf9] sm:$0xff] %vm452, %v433
        %678 = vst.msk [vmem:[%s651 + $0x101] sm:$0xff] %vm452, %v434
        %679 = vst.msk [vmem:[%s651 + $0x109] sm:$0xff] %vm452, %v435
        %680 = vrot.lane.b32.xlu0 %v412, 6
        %v681 = vpop.permute.xlu0 %680
        %682 = vrot.lane.b32.xlu0 %v413, 6
        %v683 = vpop.permute.xlu0 %682
        %684 = vrot.lane.b32.xlu0 %v414, 6
        %v685 = vpop.permute.xlu0 %684
        %686 = vrot.lane.b32.xlu0 %v415, 6
        %v687 = vpop.permute.xlu0 %686
        %688 = vrot.lane.b32.xlu0 %v416, 6
        %v689 = vpop.permute.xlu0 %688
        %690 = vrot.lane.b32.xlu0 %v417, 6
        %v691 = vpop.permute.xlu0 %690
        %692 = vrot.lane.b32.xlu0 %v418, 6
        %v693 = vpop.permute.xlu0 %692
        %694 = vrot.lane.b32.xlu0 %v419, 6
        %v695 = vpop.permute.xlu0 %694
        %696 = vrot.lane.b32.xlu0 %v420, 6
        %v697 = vpop.permute.xlu0 %696
        %698 = vrot.lane.b32.xlu0 %v421, 6
        %v699 = vpop.permute.xlu0 %698
        %700 = vrot.lane.b32.xlu0 %v422, 6
        %v701 = vpop.permute.xlu0 %700
        %702 = vrot.lane.b32.xlu0 %v423, 6
        %v703 = vpop.permute.xlu0 %702
        %704 = vrot.lane.b32.xlu0 %v424, 6
        %v705 = vpop.permute.xlu0 %704
        %706 = vrot.lane.b32.xlu0 %v425, 6
        %v707 = vpop.permute.xlu0 %706
        %708 = vrot.lane.b32.xlu0 %v426, 6
        %v709 = vpop.permute.xlu0 %708
        %710 = vrot.lane.b32.xlu0 %v427, 6
        %v711 = vpop.permute.xlu0 %710
        %712 = vrot.lane.b32.xlu0 %v428, 6
        %v713 = vpop.permute.xlu0 %712
        %714 = vrot.lane.b32.xlu0 %v429, 6
        %v715 = vpop.permute.xlu0 %714
        %716 = vrot.lane.b32.xlu0 %v430, 6
        %v717 = vpop.permute.xlu0 %716
        %718 = vrot.lane.b32.xlu0 %v431, 6
        %v719 = vpop.permute.xlu0 %718
        %720 = vrot.lane.b32.xlu0 %v432, 6
        %v721 = vpop.permute.xlu0 %720
        %722 = vrot.lane.b32.xlu0 %v433, 6
        %v723 = vpop.permute.xlu0 %722
        %724 = vrot.lane.b32.xlu0 %v434, 6
        %v725 = vpop.permute.xlu0 %724
        %726 = vrot.lane.b32.xlu0 %v435, 6
        %v727 = vpop.permute.xlu0 %726
        %728 = vrot.lane.b32.xlu0 %v436, 6
        %v729 = vpop.permute.xlu0 %728
        %730 = vrot.lane.b32.xlu0 %v437, 6
        %v731 = vpop.permute.xlu0 %730
        %732 = vrot.lane.b32.xlu0 %v438, 6
        %v733 = vpop.permute.xlu0 %732
        %734 = vrot.lane.b32.xlu0 %v439, 6
        %v735 = vpop.permute.xlu0 %734
        %vm764 = vcmask 72752
        %765 = vst.msk [vmem:[#allocation2 + $0x1] sm:$0xff] %vm764, %v681
        %766 = vst.msk [vmem:[#allocation2 + $0x9] sm:$0xff] %vm764, %v683
        %767 = vst.msk [vmem:[#allocation2 + $0x11] sm:$0xff] %vm764, %v685
        %768 = vst.msk [vmem:[#allocation2 + $0x19] sm:$0xff] %vm764, %v687
        %769 = vst.msk [vmem:[#allocation2 + $0x29] sm:$0xff] %vm764, %v689
        %770 = vst.msk [vmem:[#allocation2 + $0x31] sm:$0xff] %vm764, %v691
        %771 = vst.msk [vmem:[#allocation2 + $0x39] sm:$0xff] %vm764, %v693
        %772 = vst.msk [vmem:[#allocation2 + $0x41] sm:$0xff] %vm764, %v695
        %773 = vst.msk [vmem:[#allocation2 + $0x51] sm:$0xff] %vm764, %v697
        %774 = vst.msk [vmem:[#allocation2 + $0x59] sm:$0xff] %vm764, %v699
        %775 = vst.msk [vmem:[#allocation2 + $0x61] sm:$0xff] %vm764, %v701
        %776 = vst.msk [vmem:[#allocation2 + $0x69] sm:$0xff] %vm764, %v703
        %777 = vst.msk [vmem:[#allocation2 + $0x79] sm:$0xff] %vm764, %v705
        %778 = vst.msk [vmem:[#allocation2 + $0x81] sm:$0xff] %vm764, %v707
        %779 = vst.msk [vmem:[#allocation2 + $0x89] sm:$0xff] %vm764, %v709
        %780 = vst.msk [vmem:[#allocation2 + $0x91] sm:$0xff] %vm764, %v711
        %781 = vst.msk [vmem:[#allocation2 + $0xa1] sm:$0xff] %vm764, %v713
        %782 = vst.msk [vmem:[#allocation2 + $0xa9] sm:$0xff] %vm764, %v715
        %783 = vst.msk [vmem:[#allocation2 + $0xb1] sm:$0xff] %vm764, %v717
        %784 = vst.msk [vmem:[#allocation2 + $0xb9] sm:$0xff] %vm764, %v719
        %785 = vst.msk [vmem:[#allocation2 + $0xc9] sm:$0xff] %vm764, %v721
        %786 = vst.msk [vmem:[#allocation2 + $0xd1] sm:$0xff] %vm764, %v723
        %787 = vst.msk [vmem:[#allocation2 + $0xd9] sm:$0xff] %vm764, %v725
        %788 = vst.msk [vmem:[#allocation2 + $0xe1] sm:$0xff] %vm764, %v727
        %789 = vst.msk [vmem:[#allocation2 + $0xf1] sm:$0xff] %vm764, %v729
        %790 = vst.msk [vmem:[#allocation2 + $0xf9] sm:$0xff] %vm764, %v731
        %791 = vst.msk [vmem:[#allocation2 + $0x101] sm:$0xff] %vm764, %v733
        %792 = vst.msk [vmem:[#allocation2 + $0x109] sm:$0xff] %vm764, %v735
        %p793 = scmp.eq.s32.totalorder %s25, 3
        %v794 = vld [vmem:[%s402] sm:$0xff]
        %v795 = vld [vmem:[%s402 + $0x8] sm:$0xff]
        %v796 = vld [vmem:[%s402 + $0x10] sm:$0xff]
        %v797 = vld [vmem:[%s402 + $0x18] sm:$0xff]
        %s798 = scalar_select %p793, 1, 0
        %v799 = vstv %s798
        %vm800 = vcmp.eq.s32.totalorder %v799, 1
        %v801 = vsel %vm800, %v445, %v794
        %v802 = vsel %vm800, %v445, %v795
        %v803 = vsel %vm800, %v445, %v796
        %v804 = vsel %vm800, %v445, %v797
        %809 = vrot.lane.b32.xlu0 %v801, 6
        %v810 = vpop.permute.xlu0 %809
        %811 = vrot.lane.b32.xlu0 %v802, 6
        %v812 = vpop.permute.xlu0 %811
        %813 = vrot.lane.b32.xlu0 %v803, 6
        %v814 = vpop.permute.xlu0 %813
        %815 = vrot.lane.b32.xlu0 %v804, 6
        %v816 = vpop.permute.xlu0 %815
        %s821 = scalar_lea.vmem [#allocation2], 280
        %822 = vst.msk [vmem:[%s821 + $0x1] sm:$0xff] %vm764, %v810
        %823 = vst.msk [vmem:[%s821 + $0x9] sm:$0xff] %vm764, %v812
        %824 = vst.msk [vmem:[%s821 + $0x11] sm:$0xff] %vm764, %v814
        %825 = vst.msk [vmem:[%s821 + $0x19] sm:$0xff] %vm764, %v816
        %v826 = vld [vmem:[#allocation2] sm:$0xff]
        %v827 = vld [vmem:[#allocation2 + $0x8] sm:$0xff]
        %v828 = vld [vmem:[#allocation2 + $0x10] sm:$0xff]
        %v829 = vld [vmem:[#allocation2 + $0x18] sm:$0xff]
        %v830 = vld [vmem:[#allocation2 + $0x28] sm:$0xff]
        %v831 = vld [vmem:[#allocation2 + $0x30] sm:$0xff]
        %v832 = vld [vmem:[#allocation2 + $0x38] sm:$0xff]
        %v833 = vld [vmem:[#allocation2 + $0x40] sm:$0xff]
        %v834 = vld [vmem:[#allocation2 + $0x50] sm:$0xff]
        %v835 = vld [vmem:[#allocation2 + $0x58] sm:$0xff]
        %v836 = vld [vmem:[#allocation2 + $0x60] sm:$0xff]
        %v837 = vld [vmem:[#allocation2 + $0x68] sm:$0xff]
        %v838 = vld [vmem:[#allocation2 + $0x78] sm:$0xff]
        %v839 = vld [vmem:[#allocation2 + $0x80] sm:$0xff]
        %v840 = vld [vmem:[#allocation2 + $0x88] sm:$0xff]
        %v841 = vld [vmem:[#allocation2 + $0x90] sm:$0xff]
        %v842 = vld [vmem:[#allocation2 + $0xa0] sm:$0xff]
        %v843 = vld [vmem:[#allocation2 + $0xa8] sm:$0xff]
        %v844 = vld [vmem:[#allocation2 + $0xb0] sm:$0xff]
        %v845 = vld [vmem:[#allocation2 + $0xb8] sm:$0xff]
        %v846 = vld [vmem:[#allocation2 + $0xc8] sm:$0xff]
        %v847 = vld [vmem:[#allocation2 + $0xd0] sm:$0xff]
        %v848 = vld [vmem:[#allocation2 + $0xd8] sm:$0xff]
        %v849 = vld [vmem:[#allocation2 + $0xe0] sm:$0xff]
        %v850 = vld [vmem:[#allocation2 + $0xf0] sm:$0xff]
        %v851 = vld [vmem:[#allocation2 + $0xf8] sm:$0xff]
        %v852 = vld [vmem:[#allocation2 + $0x100] sm:$0xff]
        %v853 = vld [vmem:[#allocation2 + $0x108] sm:$0xff]
        %v854 = vld [vmem:[#allocation2 + $0x118] sm:$0xff]
        %v855 = vld [vmem:[#allocation2 + $0x120] sm:$0xff]
        %v856 = vld [vmem:[#allocation2 + $0x128] sm:$0xff]
        %v857 = vld [vmem:[#allocation2 + $0x130] sm:$0xff]
        %v858 = vld [vmem:[%s3] sm:$0xff]
        %v859 = vld [vmem:[%s3 + $0x8] sm:$0x1]
        %vm860 = vcmask 72704
        %v862 = vsel %vm860, %v826, 0
        %v865 = vsel %vm860, %v827, 0
        %v868 = vsel %vm860, %v828, 0
        %v871 = vsel %vm860, %v829, 0
        %v874 = vsel %vm860, %v830, 0
        %v877 = vsel %vm860, %v831, 0
        %v880 = vsel %vm860, %v832, 0
        %v883 = vsel %vm860, %v833, 0
        %v886 = vsel %vm860, %v834, 0
        %v889 = vsel %vm860, %v835, 0
        %v892 = vsel %vm860, %v836, 0
        %v895 = vsel %vm860, %v837, 0
        %v898 = vsel %vm860, %v838, 0
        %v901 = vsel %vm860, %v839, 0
        %v904 = vsel %vm860, %v840, 0
        %v907 = vsel %vm860, %v841, 0
        %v910 = vsel %vm860, %v842, 0
        %v913 = vsel %vm860, %v843, 0
        %v916 = vsel %vm860, %v844, 0
        %v919 = vsel %vm860, %v845, 0
        %v922 = vsel %vm860, %v846, 0
        %v925 = vsel %vm860, %v847, 0
        %v928 = vsel %vm860, %v848, 0
        %v931 = vsel %vm860, %v849, 0
        %v934 = vsel %vm860, %v850, 0
        %v937 = vsel %vm860, %v851, 0
        %v940 = vsel %vm860, %v852, 0
        %v943 = vsel %vm860, %v853, 0
        %v946 = vsel %vm860, %v854, 0
        %v949 = vsel %vm860, %v855, 0
        %v952 = vsel %vm860, %v856, 0
        %v955 = vsel %vm860, %v857, 0
        %vm957 = vcmask 1040384
        %v959 = vsel %vm957, %v859, 0
        %961 = vmatprep.subr.mxu0 0.0
        %962 = vmatpush1.msra.mxu0 0.0
        %963 = vmatprep.subr.mxu0 0.0
        %964 = vmatpush1.msra.mxu0 0.0
        %965 = vmatprep.subr.mxu0 0.0
        %966 = vmatpush1.msra.mxu0 0.0
        %967 = vmatprep.subr.mxu0 0.0
        %968 = vmatpush1.msra.mxu0 0.0
        %969 = vmatprep.subr.mxu0 0.0
        %970 = vmatpush1.msra.mxu0 0.0
        %971 = vmatprep.subr.mxu0 0.0
        %972 = vmatpush1.msra.mxu0 0.0
        %973 = vmatprep.subr.mxu0 0.0
        %974 = vmatpush1.msra.mxu0 0.0
        %975 = vmatprep.subr.mxu0 0.0
        %976 = vmatpush1.msra.mxu0 0.0
        %977 = vmatprep.subr.mxu0 0.0
        %978 = vmatpush1.msra.mxu0 0.0
        %979 = vmatprep.subr.mxu0 0.0
        %980 = vmatpush1.msra.mxu0 0.0
        %981 = vmatprep.subr.mxu0 0.0
        %982 = vmatpush1.msra.mxu0 0.0
        %983 = vmatprep.subr.mxu0 0.0
        %984 = vmatpush1.msra.mxu0 0.0
        %985 = vmatprep.subr.mxu0 0.0
        %986 = vmatpush1.msra.mxu0 0.0
        %987 = vmatprep.subr.mxu0 0.0
        %988 = vmatpush1.msra.mxu0 0.0
        %989 = vmatprep.subr.mxu0 0.0
        %990 = vmatpush1.msra.mxu0 %v959
        %991 = vmatprep.subr.mxu0 0.0
        %992 = vmatpush1.msra.mxu0 %v858
        %993 = vmatprep.subr.mxu0 0.0
        %994 = vmatpush2.msra.mxu0 0.0
        %995 = vmatprep.subr.mxu0 0.0
        %996 = vmatpush2.msra.mxu0 0.0
        %997 = vmatprep.subr.mxu0 0.0
        %998 = vmatpush2.msra.mxu0 0.0
        %999 = vmatprep.subr.mxu0 0.0
        %1000 = vmatpush2.msra.mxu0 0.0
        %1001 = vmatprep.subr.mxu0 0.0
        %1002 = vmatpush2.msra.mxu0 0.0
        %1003 = vmatprep.subr.mxu0 0.0
        %1004 = vmatpush2.msra.mxu0 0.0
        %1005 = vmatprep.subr.mxu0 0.0
        %1006 = vmatpush2.msra.mxu0 0.0
        %1007 = vmatprep.subr.mxu0 0.0
        %1008 = vmatpush2.msra.mxu0 0.0
        %1009 = vmatprep.subr.mxu0 0.0
        %1010 = vmatpush2.msra.mxu0 0.0
        %1011 = vmatprep.subr.mxu0 0.0
        %1012 = vmatpush2.msra.mxu0 0.0
        %1013 = vmatprep.subr.mxu0 0.0
        %1014 = vmatpush2.msra.mxu0 0.0
        %1015 = vmatprep.subr.mxu0 0.0
        %1016 = vmatpush2.msra.mxu0 0.0
        %1017 = vmatprep.subr.mxu0 0.0
        %1018 = vmatpush2.msra.mxu0 0.0
        %1019 = vmatprep.subr.mxu0 0.0
        %1020 = vmatpush2.msra.mxu0 0.0
        %1021 = vmatprep.subr.mxu0 0.0
        %1022 = vmatpush2.msra.mxu0 0.0
        %1023 = vmatprep.subr.mxu0 0.0
        %1024 = vmatpush2.msra.mxu0 0.0
        %1025 = vmatprep.mubr.f32.mxu0 0.0
        %1026 = vmatmul.mubr.f32.gmra.mxu0 %v862
        %v1027 = vpop.f32.mrf.mxu0
        %v1028 = vadd.f32 0.0, %v1027
        %v1029 = vpop.f32.mrf.mxu0
        %1030 = vmatprep.mubr.f32.mxu0 0.0
        %1031 = vmatmul.mubr.f32.gmra.mxu0 %v865
        %v1032 = vpop.f32.mrf.mxu0
        %v1033 = vadd.f32 0.0, %v1032
        %v1034 = vpop.f32.mrf.mxu0
        %1035 = vmatprep.mubr.f32.mxu0 0.0
        %1036 = vmatmul.mubr.f32.gmra.mxu0 %v868
        %v1037 = vpop.f32.mrf.mxu0
        %v1038 = vadd.f32 0.0, %v1037
        %v1039 = vpop.f32.mrf.mxu0
        %1040 = vmatprep.mubr.f32.mxu0 0.0
        %1041 = vmatmul.mubr.f32.gmra.mxu0 %v871
        %v1042 = vpop.f32.mrf.mxu0
        %v1043 = vadd.f32 0.0, %v1042
        %v1044 = vpop.f32.mrf.mxu0
        %1045 = vmatprep.mubr.f32.mxu0 0.0
        %1046 = vmatmul.mubr.f32.gmra.mxu0 %v874
        %v1047 = vpop.f32.mrf.mxu0
        %v1048 = vadd.f32 0.0, %v1047
        %v1049 = vpop.f32.mrf.mxu0
        %1050 = vmatprep.mubr.f32.mxu0 0.0
        %1051 = vmatmul.mubr.f32.gmra.mxu0 %v877
        %v1052 = vpop.f32.mrf.mxu0
        %v1053 = vadd.f32 0.0, %v1052
        %v1054 = vpop.f32.mrf.mxu0
        %1055 = vmatprep.mubr.f32.mxu0 0.0
        %1056 = vmatmul.mubr.f32.gmra.mxu0 %v880
        %v1057 = vpop.f32.mrf.mxu0
        %v1058 = vadd.f32 0.0, %v1057
        %v1059 = vpop.f32.mrf.mxu0
        %1060 = vmatprep.mubr.f32.mxu0 0.0
        %1061 = vmatmul.mubr.f32.gmra.mxu0 %v883
        %v1062 = vpop.f32.mrf.mxu0
        %v1063 = vadd.f32 0.0, %v1062
        %v1064 = vpop.f32.mrf.mxu0
        %1065 = vmatprep.mubr.f32.mxu0 0.0
        %1066 = vmatmul.mubr.f32.gmra.mxu0 %v886
        %v1067 = vpop.f32.mrf.mxu0
        %v1068 = vadd.f32 0.0, %v1067
        %v1069 = vpop.f32.mrf.mxu0
        %1070 = vmatprep.mubr.f32.mxu0 0.0
        %1071 = vmatmul.mubr.f32.gmra.mxu0 %v889
        %v1072 = vpop.f32.mrf.mxu0
        %v1073 = vadd.f32 0.0, %v1072
        %v1074 = vpop.f32.mrf.mxu0
        %1075 = vmatprep.mubr.f32.mxu0 0.0
        %1076 = vmatmul.mubr.f32.gmra.mxu0 %v892
        %v1077 = vpop.f32.mrf.mxu0
        %v1078 = vadd.f32 0.0, %v1077
        %v1079 = vpop.f32.mrf.mxu0
        %1080 = vmatprep.mubr.f32.mxu0 0.0
        %1081 = vmatmul.mubr.f32.gmra.mxu0 %v895
        %v1082 = vpop.f32.mrf.mxu0
        %v1083 = vadd.f32 0.0, %v1082
        %v1084 = vpop.f32.mrf.mxu0
        %1085 = vmatprep.mubr.f32.mxu0 0.0
        %1086 = vmatmul.mubr.f32.gmra.mxu0 %v898
        %v1087 = vpop.f32.mrf.mxu0
        %v1088 = vadd.f32 0.0, %v1087
        %v1089 = vpop.f32.mrf.mxu0
        %1090 = vmatprep.mubr.f32.mxu0 0.0
        %1091 = vmatmul.mubr.f32.gmra.mxu0 %v901
        %v1092 = vpop.f32.mrf.mxu0
        %v1093 = vadd.f32 0.0, %v1092
        %v1094 = vpop.f32.mrf.mxu0
        %1095 = vmatprep.mubr.f32.mxu0 0.0
        %1096 = vmatmul.mubr.f32.gmra.mxu0 %v904
        %v1097 = vpop.f32.mrf.mxu0
        %v1098 = vadd.f32 0.0, %v1097
        %v1099 = vpop.f32.mrf.mxu0
        %1100 = vmatprep.mubr.f32.mxu0 0.0
        %1101 = vmatmul.mubr.f32.gmra.mxu0 %v907
        %v1102 = vpop.f32.mrf.mxu0
        %v1103 = vadd.f32 0.0, %v1102
        %v1104 = vpop.f32.mrf.mxu0
        %1105 = vmatprep.mubr.f32.mxu0 0.0
        %1106 = vmatmul.mubr.f32.gmra.mxu0 %v910
        %v1107 = vpop.f32.mrf.mxu0
        %v1108 = vadd.f32 0.0, %v1107
        %v1109 = vpop.f32.mrf.mxu0
        %1110 = vmatprep.mubr.f32.mxu0 0.0
        %1111 = vmatmul.mubr.f32.gmra.mxu0 %v913
        %v1112 = vpop.f32.mrf.mxu0
        %v1113 = vadd.f32 0.0, %v1112
        %v1114 = vpop.f32.mrf.mxu0
        %1115 = vmatprep.mubr.f32.mxu0 0.0
        %1116 = vmatmul.mubr.f32.gmra.mxu0 %v916
        %v1117 = vpop.f32.mrf.mxu0
        %v1118 = vadd.f32 0.0, %v1117
        %v1119 = vpop.f32.mrf.mxu0
        %1120 = vmatprep.mubr.f32.mxu0 0.0
        %1121 = vmatmul.mubr.f32.gmra.mxu0 %v919
        %v1122 = vpop.f32.mrf.mxu0
        %v1123 = vadd.f32 0.0, %v1122
        %v1124 = vpop.f32.mrf.mxu0
        %1125 = vmatprep.mubr.f32.mxu0 0.0
        %1126 = vmatmul.mubr.f32.gmra.mxu0 %v922
        %v1127 = vpop.f32.mrf.mxu0
        %v1128 = vadd.f32 0.0, %v1127
        %v1129 = vpop.f32.mrf.mxu0
        %1130 = vmatprep.mubr.f32.mxu0 0.0
        %1131 = vmatmul.mubr.f32.gmra.mxu0 %v925
        %v1132 = vpop.f32.mrf.mxu0
        %v1133 = vadd.f32 0.0, %v1132
        %v1134 = vpop.f32.mrf.mxu0
        %1135 = vmatprep.mubr.f32.mxu0 0.0
        %1136 = vmatmul.mubr.f32.gmra.mxu0 %v928
        %v1137 = vpop.f32.mrf.mxu0
        %v1138 = vadd.f32 0.0, %v1137
        %v1139 = vpop.f32.mrf.mxu0
        %1140 = vmatprep.mubr.f32.mxu0 0.0
        %1141 = vmatmul.mubr.f32.gmra.mxu0 %v931
        %v1142 = vpop.f32.mrf.mxu0
        %v1143 = vadd.f32 0.0, %v1142
        %v1144 = vpop.f32.mrf.mxu0
        %1145 = vmatprep.mubr.f32.mxu0 0.0
        %1146 = vmatmul.mubr.f32.gmra.mxu0 %v934
        %v1147 = vpop.f32.mrf.mxu0
        %v1148 = vadd.f32 0.0, %v1147
        %v1149 = vpop.f32.mrf.mxu0
        %1150 = vmatprep.mubr.f32.mxu0 0.0
        %1151 = vmatmul.mubr.f32.gmra.mxu0 %v937
        %v1152 = vpop.f32.mrf.mxu0
        %v1153 = vadd.f32 0.0, %v1152
        %v1154 = vpop.f32.mrf.mxu0
        %1155 = vmatprep.mubr.f32.mxu0 0.0
        %1156 = vmatmul.mubr.f32.gmra.mxu0 %v940
        %v1157 = vpop.f32.mrf.mxu0
        %v1158 = vadd.f32 0.0, %v1157
        %v1159 = vpop.f32.mrf.mxu0
        %1160 = vmatprep.mubr.f32.mxu0 0.0
        %1161 = vmatmul.mubr.f32.gmra.mxu0 %v943
        %v1162 = vpop.f32.mrf.mxu0
        %v1163 = vadd.f32 0.0, %v1162
        %v1164 = vpop.f32.mrf.mxu0
        %1165 = vmatprep.mubr.f32.mxu0 0.0
        %1166 = vmatmul.mubr.f32.gmra.mxu0 %v946
        %v1167 = vpop.f32.mrf.mxu0
        %v1168 = vadd.f32 0.0, %v1167
        %v1169 = vpop.f32.mrf.mxu0
        %1170 = vmatprep.mubr.f32.mxu0 0.0
        %1171 = vmatmul.mubr.f32.gmra.mxu0 %v949
        %v1172 = vpop.f32.mrf.mxu0
        %v1173 = vadd.f32 0.0, %v1172
        %v1174 = vpop.f32.mrf.mxu0
        %1175 = vmatprep.mubr.f32.mxu0 0.0
        %1176 = vmatmul.mubr.f32.gmra.mxu0 %v952
        %v1177 = vpop.f32.mrf.mxu0
        %v1178 = vadd.f32 0.0, %v1177
        %v1179 = vpop.f32.mrf.mxu0
        %1180 = vmatprep.mubr.f32.mxu0 0.0
        %1181 = vmatmul.mubr.f32.gmra.mxu0 %v955
        %v1182 = vpop.f32.mrf.mxu0
        %v1183 = vadd.f32 0.0, %v1182
        %v1184 = vpop.f32.mrf.mxu0
        %1185 = vdwg.mxu0
        %vm1186 = vcmask 523264
        %1187 = vst.msk [vmem:[#allocation3] sm:$0xff] %vm1186, %v1028
        %1188 = vst.msk [vmem:[#allocation3 + $0x8] sm:$0xff] %vm1186, %v1033
        %1189 = vst.msk [vmem:[#allocation3 + $0x10] sm:$0xff] %vm1186, %v1038
        %1190 = vst.msk [vmem:[#allocation3 + $0x18] sm:$0xff] %vm1186, %v1043
        %1191 = vst.msk [vmem:[#allocation3 + $0x20] sm:$0xff] %vm1186, %v1048
        %1192 = vst.msk [vmem:[#allocation3 + $0x28] sm:$0xff] %vm1186, %v1053
        %1193 = vst.msk [vmem:[#allocation3 + $0x30] sm:$0xff] %vm1186, %v1058
        %1194 = vst.msk [vmem:[#allocation3 + $0x38] sm:$0xff] %vm1186, %v1063
        %1195 = vst.msk [vmem:[#allocation3 + $0x40] sm:$0xff] %vm1186, %v1068
        %1196 = vst.msk [vmem:[#allocation3 + $0x48] sm:$0xff] %vm1186, %v1073
        %1197 = vst.msk [vmem:[#allocation3 + $0x50] sm:$0xff] %vm1186, %v1078
        %1198 = vst.msk [vmem:[#allocation3 + $0x58] sm:$0xff] %vm1186, %v1083
        %1199 = vst.msk [vmem:[#allocation3 + $0x60] sm:$0xff] %vm1186, %v1088
        %1200 = vst.msk [vmem:[#allocation3 + $0x68] sm:$0xff] %vm1186, %v1093
        %1201 = vst.msk [vmem:[#allocation3 + $0x70] sm:$0xff] %vm1186, %v1098
        %1202 = vst.msk [vmem:[#allocation3 + $0x78] sm:$0xff] %vm1186, %v1103
        %1203 = vst.msk [vmem:[#allocation3 + $0x80] sm:$0xff] %vm1186, %v1108
        %1204 = vst.msk [vmem:[#allocation3 + $0x88] sm:$0xff] %vm1186, %v1113
        %1205 = vst.msk [vmem:[#allocation3 + $0x90] sm:$0xff] %vm1186, %v1118
        %1206 = vst.msk [vmem:[#allocation3 + $0x98] sm:$0xff] %vm1186, %v1123
        %1207 = vst.msk [vmem:[#allocation3 + $0xa0] sm:$0xff] %vm1186, %v1128
        %1208 = vst.msk [vmem:[#allocation3 + $0xa8] sm:$0xff] %vm1186, %v1133
        %1209 = vst.msk [vmem:[#allocation3 + $0xb0] sm:$0xff] %vm1186, %v1138
        %1210 = vst.msk [vmem:[#allocation3 + $0xb8] sm:$0xff] %vm1186, %v1143
        %1211 = vst.msk [vmem:[#allocation3 + $0xc0] sm:$0xff] %vm1186, %v1148
        %1212 = vst.msk [vmem:[#allocation3 + $0xc8] sm:$0xff] %vm1186, %v1153
        %1213 = vst.msk [vmem:[#allocation3 + $0xd0] sm:$0xff] %vm1186, %v1158
        %1214 = vst.msk [vmem:[#allocation3 + $0xd8] sm:$0xff] %vm1186, %v1163
        %1215 = vst.msk [vmem:[#allocation3 + $0xe0] sm:$0xff] %vm1186, %v1168
        %1216 = vst.msk [vmem:[#allocation3 + $0xe8] sm:$0xff] %vm1186, %v1173
        %1217 = vst.msk [vmem:[#allocation3 + $0xf0] sm:$0xff] %vm1186, %v1178
        %1218 = vst.msk [vmem:[#allocation3 + $0xf8] sm:$0xff] %vm1186, %v1183
        %v1219 = vld [vmem:[#allocation3] sm:$0xff]
        %v1220 = vld [vmem:[#allocation3 + $0x8] sm:$0xff]
        %v1221 = vld [vmem:[#allocation3 + $0x10] sm:$0xff]
        %v1222 = vld [vmem:[#allocation3 + $0x18] sm:$0xff]
        %v1223 = vld [vmem:[#allocation3 + $0x20] sm:$0xff]
        %v1224 = vld [vmem:[#allocation3 + $0x28] sm:$0xff]
        %v1225 = vld [vmem:[#allocation3 + $0x30] sm:$0xff]
        %v1226 = vld [vmem:[#allocation3 + $0x38] sm:$0xff]
        %v1227 = vld [vmem:[#allocation3 + $0x40] sm:$0xff]
        %v1228 = vld [vmem:[#allocation3 + $0x48] sm:$0xff]
        %v1229 = vld [vmem:[#allocation3 + $0x50] sm:$0xff]
        %v1230 = vld [vmem:[#allocation3 + $0x58] sm:$0xff]
        %v1231 = vld [vmem:[#allocation3 + $0x60] sm:$0xff]
        %v1232 = vld [vmem:[#allocation3 + $0x68] sm:$0xff]
        %v1233 = vld [vmem:[#allocation3 + $0x70] sm:$0xff]
        %v1234 = vld [vmem:[#allocation3 + $0x78] sm:$0xff]
        %v1235 = vld [vmem:[#allocation3 + $0x80] sm:$0xff]
        %v1236 = vld [vmem:[#allocation3 + $0x88] sm:$0xff]
        %v1237 = vld [vmem:[#allocation3 + $0x90] sm:$0xff]
        %v1238 = vld [vmem:[#allocation3 + $0x98] sm:$0xff]
        %v1239 = vld [vmem:[#allocation3 + $0xa0] sm:$0xff]
        %v1240 = vld [vmem:[#allocation3 + $0xa8] sm:$0xff]
        %v1241 = vld [vmem:[#allocation3 + $0xb0] sm:$0xff]
        %v1242 = vld [vmem:[#allocation3 + $0xb8] sm:$0xff]
        %v1243 = vld [vmem:[#allocation3 + $0xc0] sm:$0xff]
        %v1244 = vld [vmem:[#allocation3 + $0xc8] sm:$0xff]
        %v1245 = vld [vmem:[#allocation3 + $0xd0] sm:$0xff]
        %v1246 = vld [vmem:[#allocation3 + $0xd8] sm:$0xff]
        %v1247 = vld [vmem:[#allocation3 + $0xe0] sm:$0xff]
        %v1248 = vld [vmem:[#allocation3 + $0xe8] sm:$0xff]
        %v1249 = vld [vmem:[#allocation3 + $0xf0] sm:$0xff]
        %v1250 = vld [vmem:[#allocation3 + $0xf8] sm:$0xff]
        %v1251 = vld [vmem:[#allocation2 + $0x1] sm:$0xff]
        %v1252 = vld [vmem:[#allocation2 + $0x9] sm:$0xff]
        %v1253 = vld [vmem:[#allocation2 + $0x11] sm:$0xff]
        %v1254 = vld [vmem:[#allocation2 + $0x19] sm:$0xff]
        %v1255 = vld [vmem:[#allocation2 + $0x29] sm:$0xff]
        %v1256 = vld [vmem:[#allocation2 + $0x31] sm:$0xff]
        %v1257 = vld [vmem:[#allocation2 + $0x39] sm:$0xff]
        %v1258 = vld [vmem:[#allocation2 + $0x41] sm:$0xff]
        %v1259 = vld [vmem:[#allocation2 + $0x51] sm:$0xff]
        %v1260 = vld [vmem:[#allocation2 + $0x59] sm:$0xff]
        %v1261 = vld [vmem:[#allocation2 + $0x61] sm:$0xff]
        %v1262 = vld [vmem:[#allocation2 + $0x69] sm:$0xff]
        %v1263 = vld [vmem:[#allocation2 + $0x79] sm:$0xff]
        %v1264 = vld [vmem:[#allocation2 + $0x81] sm:$0xff]
        %v1265 = vld [vmem:[#allocation2 + $0x89] sm:$0xff]
        %v1266 = vld [vmem:[#allocation2 + $0x91] sm:$0xff]
        %v1267 = vld [vmem:[#allocation2 + $0xa1] sm:$0xff]
        %v1268 = vld [vmem:[#allocation2 + $0xa9] sm:$0xff]
        %v1269 = vld [vmem:[#allocation2 + $0xb1] sm:$0xff]
        %v1270 = vld [vmem:[#allocation2 + $0xb9] sm:$0xff]
        %v1271 = vld [vmem:[#allocation2 + $0xc9] sm:$0xff]
        %v1272 = vld [vmem:[#allocation2 + $0xd1] sm:$0xff]
        %v1273 = vld [vmem:[#allocation2 + $0xd9] sm:$0xff]
        %v1274 = vld [vmem:[#allocation2 + $0xe1] sm:$0xff]
        %v1275 = vld [vmem:[#allocation2 + $0xf1] sm:$0xff]
        %v1276 = vld [vmem:[#allocation2 + $0xf9] sm:$0xff]
        %v1277 = vld [vmem:[#allocation2 + $0x101] sm:$0xff]
        %v1278 = vld [vmem:[#allocation2 + $0x109] sm:$0xff]
        %v1279 = vld [vmem:[#allocation2 + $0x119] sm:$0xff]
        %v1280 = vld [vmem:[#allocation2 + $0x121] sm:$0xff]
        %v1281 = vld [vmem:[#allocation2 + $0x129] sm:$0xff]
        %v1282 = vld [vmem:[#allocation2 + $0x131] sm:$0xff]
        %s1283 = scalar_lea.vmem %s3, 16
        %v1284 = vld [vmem:[%s1283] sm:$0xff]
        %v1285 = vld [vmem:[%s1283 + $0x8] sm:$0x1]
        %v1287 = vsel %vm860, %v1251, 0
        %v1290 = vsel %vm860, %v1252, 0
        %v1293 = vsel %vm860, %v1253, 0
        %v1296 = vsel %vm860, %v1254, 0
        %v1299 = vsel %vm860, %v1255, 0
        %v1302 = vsel %vm860, %v1256, 0
        %v1305 = vsel %vm860, %v1257, 0
        %v1308 = vsel %vm860, %v1258, 0
        %v1311 = vsel %vm860, %v1259, 0
        %v1314 = vsel %vm860, %v1260, 0
        %v1317 = vsel %vm860, %v1261, 0
        %v1320 = vsel %vm860, %v1262, 0
        %v1323 = vsel %vm860, %v1263, 0
        %v1326 = vsel %vm860, %v1264, 0
        %v1329 = vsel %vm860, %v1265, 0
        %v1332 = vsel %vm860, %v1266, 0
        %v1335 = vsel %vm860, %v1267, 0
        %v1338 = vsel %vm860, %v1268, 0
        %v1341 = vsel %vm860, %v1269, 0
        %v1344 = vsel %vm860, %v1270, 0
        %v1347 = vsel %vm860, %v1271, 0
        %v1350 = vsel %vm860, %v1272, 0
        %v1353 = vsel %vm860, %v1273, 0
        %v1356 = vsel %vm860, %v1274, 0
        %v1359 = vsel %vm860, %v1275, 0
        %v1362 = vsel %vm860, %v1276, 0
        %v1365 = vsel %vm860, %v1277, 0
        %v1368 = vsel %vm860, %v1278, 0
        %v1371 = vsel %vm860, %v1279, 0
        %v1374 = vsel %vm860, %v1280, 0
        %v1377 = vsel %vm860, %v1281, 0
        %v1380 = vsel %vm860, %v1282, 0
        %v1383 = vsel %vm957, %v1285, 0
        %1385 = vmatprep.subr.mxu0 0.0
        %1386 = vmatpush1.msra.mxu0 0.0
        %1387 = vmatprep.subr.mxu0 0.0
        %1388 = vmatpush1.msra.mxu0 0.0
        %1389 = vmatprep.subr.mxu0 0.0
        %1390 = vmatpush1.msra.mxu0 0.0
        %1391 = vmatprep.subr.mxu0 0.0
        %1392 = vmatpush1.msra.mxu0 0.0
        %1393 = vmatprep.subr.mxu0 0.0
        %1394 = vmatpush1.msra.mxu0 0.0
        %1395 = vmatprep.subr.mxu0 0.0
        %1396 = vmatpush1.msra.mxu0 0.0
        %1397 = vmatprep.subr.mxu0 0.0
        %1398 = vmatpush1.msra.mxu0 0.0
        %1399 = vmatprep.subr.mxu0 0.0
        %1400 = vmatpush1.msra.mxu0 0.0
        %1401 = vmatprep.subr.mxu0 0.0
        %1402 = vmatpush1.msra.mxu0 0.0
        %1403 = vmatprep.subr.mxu0 0.0
        %1404 = vmatpush1.msra.mxu0 0.0
        %1405 = vmatprep.subr.mxu0 0.0
        %1406 = vmatpush1.msra.mxu0 0.0
        %1407 = vmatprep.subr.mxu0 0.0
        %1408 = vmatpush1.msra.mxu0 0.0
        %1409 = vmatprep.subr.mxu0 0.0
        %1410 = vmatpush1.msra.mxu0 0.0
        %1411 = vmatprep.subr.mxu0 0.0
        %1412 = vmatpush1.msra.mxu0 0.0
        %1413 = vmatprep.subr.mxu0 0.0
        %1414 = vmatpush1.msra.mxu0 %v1383
        %1415 = vmatprep.subr.mxu0 0.0
        %1416 = vmatpush1.msra.mxu0 %v1284
        %1417 = vmatprep.subr.mxu0 0.0
        %1418 = vmatpush2.msra.mxu0 0.0
        %1419 = vmatprep.subr.mxu0 0.0
        %1420 = vmatpush2.msra.mxu0 0.0
        %1421 = vmatprep.subr.mxu0 0.0
        %1422 = vmatpush2.msra.mxu0 0.0
        %1423 = vmatprep.subr.mxu0 0.0
        %1424 = vmatpush2.msra.mxu0 0.0
        %1425 = vmatprep.subr.mxu0 0.0
        %1426 = vmatpush2.msra.mxu0 0.0
        %1427 = vmatprep.subr.mxu0 0.0
        %1428 = vmatpush2.msra.mxu0 0.0
        %1429 = vmatprep.subr.mxu0 0.0
        %1430 = vmatpush2.msra.mxu0 0.0
        %1431 = vmatprep.subr.mxu0 0.0
        %1432 = vmatpush2.msra.mxu0 0.0
        %1433 = vmatprep.subr.mxu0 0.0
        %1434 = vmatpush2.msra.mxu0 0.0
        %1435 = vmatprep.subr.mxu0 0.0
        %1436 = vmatpush2.msra.mxu0 0.0
        %1437 = vmatprep.subr.mxu0 0.0
        %1438 = vmatpush2.msra.mxu0 0.0
        %1439 = vmatprep.subr.mxu0 0.0
        %1440 = vmatpush2.msra.mxu0 0.0
        %1441 = vmatprep.subr.mxu0 0.0
        %1442 = vmatpush2.msra.mxu0 0.0
        %1443 = vmatprep.subr.mxu0 0.0
        %1444 = vmatpush2.msra.mxu0 0.0
        %1445 = vmatprep.subr.mxu0 0.0
        %1446 = vmatpush2.msra.mxu0 0.0
        %1447 = vmatprep.subr.mxu0 0.0
        %1448 = vmatpush2.msra.mxu0 0.0
        %1449 = vmatprep.mubr.f32.mxu0 0.0
        %1450 = vmatmul.mubr.f32.gmra.mxu0 %v1287
        %v1451 = vpop.f32.mrf.mxu0
        %v1452 = vadd.f32 0.0, %v1451
        %v1453 = vpop.f32.mrf.mxu0
        %1454 = vmatprep.mubr.f32.mxu0 0.0
        %1455 = vmatmul.mubr.f32.gmra.mxu0 %v1290
        %v1456 = vpop.f32.mrf.mxu0
        %v1457 = vadd.f32 0.0, %v1456
        %v1458 = vpop.f32.mrf.mxu0
        %1459 = vmatprep.mubr.f32.mxu0 0.0
        %1460 = vmatmul.mubr.f32.gmra.mxu0 %v1293
        %v1461 = vpop.f32.mrf.mxu0
        %v1462 = vadd.f32 0.0, %v1461
        %v1463 = vpop.f32.mrf.mxu0
        %1464 = vmatprep.mubr.f32.mxu0 0.0
        %1465 = vmatmul.mubr.f32.gmra.mxu0 %v1296
        %v1466 = vpop.f32.mrf.mxu0
        %v1467 = vadd.f32 0.0, %v1466
        %v1468 = vpop.f32.mrf.mxu0
        %1469 = vmatprep.mubr.f32.mxu0 0.0
        %1470 = vmatmul.mubr.f32.gmra.mxu0 %v1299
        %v1471 = vpop.f32.mrf.mxu0
        %v1472 = vadd.f32 0.0, %v1471
        %v1473 = vpop.f32.mrf.mxu0
        %1474 = vmatprep.mubr.f32.mxu0 0.0
        %1475 = vmatmul.mubr.f32.gmra.mxu0 %v1302
        %v1476 = vpop.f32.mrf.mxu0
        %v1477 = vadd.f32 0.0, %v1476
        %v1478 = vpop.f32.mrf.mxu0
        %1479 = vmatprep.mubr.f32.mxu0 0.0
        %1480 = vmatmul.mubr.f32.gmra.mxu0 %v1305
        %v1481 = vpop.f32.mrf.mxu0
        %v1482 = vadd.f32 0.0, %v1481
        %v1483 = vpop.f32.mrf.mxu0
        %1484 = vmatprep.mubr.f32.mxu0 0.0
        %1485 = vmatmul.mubr.f32.gmra.mxu0 %v1308
        %v1486 = vpop.f32.mrf.mxu0
        %v1487 = vadd.f32 0.0, %v1486
        %v1488 = vpop.f32.mrf.mxu0
        %1489 = vmatprep.mubr.f32.mxu0 0.0
        %1490 = vmatmul.mubr.f32.gmra.mxu0 %v1311
        %v1491 = vpop.f32.mrf.mxu0
        %v1492 = vadd.f32 0.0, %v1491
        %v1493 = vpop.f32.mrf.mxu0
        %1494 = vmatprep.mubr.f32.mxu0 0.0
        %1495 = vmatmul.mubr.f32.gmra.mxu0 %v1314
        %v1496 = vpop.f32.mrf.mxu0
        %v1497 = vadd.f32 0.0, %v1496
        %v1498 = vpop.f32.mrf.mxu0
        %1499 = vmatprep.mubr.f32.mxu0 0.0
        %1500 = vmatmul.mubr.f32.gmra.mxu0 %v1317
        %v1501 = vpop.f32.mrf.mxu0
        %v1502 = vadd.f32 0.0, %v1501
        %v1503 = vpop.f32.mrf.mxu0
        %1504 = vmatprep.mubr.f32.mxu0 0.0
        %1505 = vmatmul.mubr.f32.gmra.mxu0 %v1320
        %v1506 = vpop.f32.mrf.mxu0
        %v1507 = vadd.f32 0.0, %v1506
        %v1508 = vpop.f32.mrf.mxu0
        %1509 = vmatprep.mubr.f32.mxu0 0.0
        %1510 = vmatmul.mubr.f32.gmra.mxu0 %v1323
        %v1511 = vpop.f32.mrf.mxu0
        %v1512 = vadd.f32 0.0, %v1511
        %v1513 = vpop.f32.mrf.mxu0
        %1514 = vmatprep.mubr.f32.mxu0 0.0
        %1515 = vmatmul.mubr.f32.gmra.mxu0 %v1326
        %v1516 = vpop.f32.mrf.mxu0
        %v1517 = vadd.f32 0.0, %v1516
        %v1518 = vpop.f32.mrf.mxu0
        %1519 = vmatprep.mubr.f32.mxu0 0.0
        %1520 = vmatmul.mubr.f32.gmra.mxu0 %v1329
        %v1521 = vpop.f32.mrf.mxu0
        %v1522 = vadd.f32 0.0, %v1521
        %v1523 = vpop.f32.mrf.mxu0
        %1524 = vmatprep.mubr.f32.mxu0 0.0
        %1525 = vmatmul.mubr.f32.gmra.mxu0 %v1332
        %v1526 = vpop.f32.mrf.mxu0
        %v1527 = vadd.f32 0.0, %v1526
        %v1528 = vpop.f32.mrf.mxu0
        %1529 = vmatprep.mubr.f32.mxu0 0.0
        %1530 = vmatmul.mubr.f32.gmra.mxu0 %v1335
        %v1531 = vpop.f32.mrf.mxu0
        %v1532 = vadd.f32 0.0, %v1531
        %v1533 = vpop.f32.mrf.mxu0
        %1534 = vmatprep.mubr.f32.mxu0 0.0
        %1535 = vmatmul.mubr.f32.gmra.mxu0 %v1338
        %v1536 = vpop.f32.mrf.mxu0
        %v1537 = vadd.f32 0.0, %v1536
        %v1538 = vpop.f32.mrf.mxu0
        %1539 = vmatprep.mubr.f32.mxu0 0.0
        %1540 = vmatmul.mubr.f32.gmra.mxu0 %v1341
        %v1541 = vpop.f32.mrf.mxu0
        %v1542 = vadd.f32 0.0, %v1541
        %v1543 = vpop.f32.mrf.mxu0
        %1544 = vmatprep.mubr.f32.mxu0 0.0
        %1545 = vmatmul.mubr.f32.gmra.mxu0 %v1344
        %v1546 = vpop.f32.mrf.mxu0
        %v1547 = vadd.f32 0.0, %v1546
        %v1548 = vpop.f32.mrf.mxu0
        %1549 = vmatprep.mubr.f32.mxu0 0.0
        %1550 = vmatmul.mubr.f32.gmra.mxu0 %v1347
        %v1551 = vpop.f32.mrf.mxu0
        %v1552 = vadd.f32 0.0, %v1551
        %v1553 = vpop.f32.mrf.mxu0
        %1554 = vmatprep.mubr.f32.mxu0 0.0
        %1555 = vmatmul.mubr.f32.gmra.mxu0 %v1350
        %v1556 = vpop.f32.mrf.mxu0
        %v1557 = vadd.f32 0.0, %v1556
        %v1558 = vpop.f32.mrf.mxu0
        %1559 = vmatprep.mubr.f32.mxu0 0.0
        %1560 = vmatmul.mubr.f32.gmra.mxu0 %v1353
        %v1561 = vpop.f32.mrf.mxu0
        %v1562 = vadd.f32 0.0, %v1561
        %v1563 = vpop.f32.mrf.mxu0
        %1564 = vmatprep.mubr.f32.mxu0 0.0
        %1565 = vmatmul.mubr.f32.gmra.mxu0 %v1356
        %v1566 = vpop.f32.mrf.mxu0
        %v1567 = vadd.f32 0.0, %v1566
        %v1568 = vpop.f32.mrf.mxu0
        %1569 = vmatprep.mubr.f32.mxu0 0.0
        %1570 = vmatmul.mubr.f32.gmra.mxu0 %v1359
        %v1571 = vpop.f32.mrf.mxu0
        %v1572 = vadd.f32 0.0, %v1571
        %v1573 = vpop.f32.mrf.mxu0
        %1574 = vmatprep.mubr.f32.mxu0 0.0
        %1575 = vmatmul.mubr.f32.gmra.mxu0 %v1362
        %v1576 = vpop.f32.mrf.mxu0
        %v1577 = vadd.f32 0.0, %v1576
        %v1578 = vpop.f32.mrf.mxu0
        %1579 = vmatprep.mubr.f32.mxu0 0.0
        %1580 = vmatmul.mubr.f32.gmra.mxu0 %v1365
        %v1581 = vpop.f32.mrf.mxu0
        %v1582 = vadd.f32 0.0, %v1581
        %v1583 = vpop.f32.mrf.mxu0
        %1584 = vmatprep.mubr.f32.mxu0 0.0
        %1585 = vmatmul.mubr.f32.gmra.mxu0 %v1368
        %v1586 = vpop.f32.mrf.mxu0
        %v1587 = vadd.f32 0.0, %v1586
        %v1588 = vpop.f32.mrf.mxu0
        %1589 = vmatprep.mubr.f32.mxu0 0.0
        %1590 = vmatmul.mubr.f32.gmra.mxu0 %v1371
        %v1591 = vpop.f32.mrf.mxu0
        %v1592 = vadd.f32 0.0, %v1591
        %v1593 = vpop.f32.mrf.mxu0
        %1594 = vmatprep.mubr.f32.mxu0 0.0
        %1595 = vmatmul.mubr.f32.gmra.mxu0 %v1374
        %v1596 = vpop.f32.mrf.mxu0
        %v1597 = vadd.f32 0.0, %v1596
        %v1598 = vpop.f32.mrf.mxu0
        %1599 = vmatprep.mubr.f32.mxu0 0.0
        %1600 = vmatmul.mubr.f32.gmra.mxu0 %v1377
        %v1601 = vpop.f32.mrf.mxu0
        %v1602 = vadd.f32 0.0, %v1601
        %v1603 = vpop.f32.mrf.mxu0
        %1604 = vmatprep.mubr.f32.mxu0 0.0
        %1605 = vmatmul.mubr.f32.gmra.mxu0 %v1380
        %v1606 = vpop.f32.mrf.mxu0
        %v1607 = vadd.f32 0.0, %v1606
        %v1608 = vpop.f32.mrf.mxu0
        %1609 = vdwg.mxu0
        %v1610 = vadd.f32 %v1219, %v1452
        %v1611 = vadd.f32 %v1220, %v1457
        %v1612 = vadd.f32 %v1221, %v1462
        %v1613 = vadd.f32 %v1222, %v1467
        %v1614 = vadd.f32 %v1223, %v1472
        %v1615 = vadd.f32 %v1224, %v1477
        %v1616 = vadd.f32 %v1225, %v1482
        %v1617 = vadd.f32 %v1226, %v1487
        %v1618 = vadd.f32 %v1227, %v1492
        %v1619 = vadd.f32 %v1228, %v1497
        %v1620 = vadd.f32 %v1229, %v1502
        %v1621 = vadd.f32 %v1230, %v1507
        %v1622 = vadd.f32 %v1231, %v1512
        %v1623 = vadd.f32 %v1232, %v1517
        %v1624 = vadd.f32 %v1233, %v1522
        %v1625 = vadd.f32 %v1234, %v1527
        %v1626 = vadd.f32 %v1235, %v1532
        %v1627 = vadd.f32 %v1236, %v1537
        %v1628 = vadd.f32 %v1237, %v1542
        %v1629 = vadd.f32 %v1238, %v1547
        %v1630 = vadd.f32 %v1239, %v1552
        %v1631 = vadd.f32 %v1240, %v1557
        %v1632 = vadd.f32 %v1241, %v1562
        %v1633 = vadd.f32 %v1242, %v1567
        %v1634 = vadd.f32 %v1243, %v1572
        %v1635 = vadd.f32 %v1244, %v1577
        %v1636 = vadd.f32 %v1245, %v1582
        %v1637 = vadd.f32 %v1246, %v1587
        %v1638 = vadd.f32 %v1247, %v1592
        %v1639 = vadd.f32 %v1248, %v1597
        %v1640 = vadd.f32 %v1249, %v1602
        %v1641 = vadd.f32 %v1250, %v1607
        %1642 = vst.msk [vmem:[#allocation3] sm:$0xff] %vm1186, %v1610
        %1643 = vst.msk [vmem:[#allocation3 + $0x8] sm:$0xff] %vm1186, %v1611
        %1644 = vst.msk [vmem:[#allocation3 + $0x10] sm:$0xff] %vm1186, %v1612
        %1645 = vst.msk [vmem:[#allocation3 + $0x18] sm:$0xff] %vm1186, %v1613
        %1646 = vst.msk [vmem:[#allocation3 + $0x20] sm:$0xff] %vm1186, %v1614
        %1647 = vst.msk [vmem:[#allocation3 + $0x28] sm:$0xff] %vm1186, %v1615
        %1648 = vst.msk [vmem:[#allocation3 + $0x30] sm:$0xff] %vm1186, %v1616
        %1649 = vst.msk [vmem:[#allocation3 + $0x38] sm:$0xff] %vm1186, %v1617
        %1650 = vst.msk [vmem:[#allocation3 + $0x40] sm:$0xff] %vm1186, %v1618
        %1651 = vst.msk [vmem:[#allocation3 + $0x48] sm:$0xff] %vm1186, %v1619
        %1652 = vst.msk [vmem:[#allocation3 + $0x50] sm:$0xff] %vm1186, %v1620
        %1653 = vst.msk [vmem:[#allocation3 + $0x58] sm:$0xff] %vm1186, %v1621
        %1654 = vst.msk [vmem:[#allocation3 + $0x60] sm:$0xff] %vm1186, %v1622
        %1655 = vst.msk [vmem:[#allocation3 + $0x68] sm:$0xff] %vm1186, %v1623
        %1656 = vst.msk [vmem:[#allocation3 + $0x70] sm:$0xff] %vm1186, %v1624
        %1657 = vst.msk [vmem:[#allocation3 + $0x78] sm:$0xff] %vm1186, %v1625
        %1658 = vst.msk [vmem:[#allocation3 + $0x80] sm:$0xff] %vm1186, %v1626
        %1659 = vst.msk [vmem:[#allocation3 + $0x88] sm:$0xff] %vm1186, %v1627
        %1660 = vst.msk [vmem:[#allocation3 + $0x90] sm:$0xff] %vm1186, %v1628
        %1661 = vst.msk [vmem:[#allocation3 + $0x98] sm:$0xff] %vm1186, %v1629
        %1662 = vst.msk [vmem:[#allocation3 + $0xa0] sm:$0xff] %vm1186, %v1630
        %1663 = vst.msk [vmem:[#allocation3 + $0xa8] sm:$0xff] %vm1186, %v1631
        %1664 = vst.msk [vmem:[#allocation3 + $0xb0] sm:$0xff] %vm1186, %v1632
        %1665 = vst.msk [vmem:[#allocation3 + $0xb8] sm:$0xff] %vm1186, %v1633
        %1666 = vst.msk [vmem:[#allocation3 + $0xc0] sm:$0xff] %vm1186, %v1634
        %1667 = vst.msk [vmem:[#allocation3 + $0xc8] sm:$0xff] %vm1186, %v1635
        %1668 = vst.msk [vmem:[#allocation3 + $0xd0] sm:$0xff] %vm1186, %v1636
        %1669 = vst.msk [vmem:[#allocation3 + $0xd8] sm:$0xff] %vm1186, %v1637
        %1670 = vst.msk [vmem:[#allocation3 + $0xe0] sm:$0xff] %vm1186, %v1638
        %1671 = vst.msk [vmem:[#allocation3 + $0xe8] sm:$0xff] %vm1186, %v1639
        %1672 = vst.msk [vmem:[#allocation3 + $0xf0] sm:$0xff] %vm1186, %v1640
        %1673 = vst.msk [vmem:[#allocation3 + $0xf8] sm:$0xff] %vm1186, %v1641
        %v1674 = vld [vmem:[#allocation3] sm:$0xff]
        %v1675 = vld [vmem:[#allocation3 + $0x8] sm:$0xff]
        %v1676 = vld [vmem:[#allocation3 + $0x10] sm:$0xff]
        %v1677 = vld [vmem:[#allocation3 + $0x18] sm:$0xff]
        %v1678 = vld [vmem:[#allocation3 + $0x20] sm:$0xff]
        %v1679 = vld [vmem:[#allocation3 + $0x28] sm:$0xff]
        %v1680 = vld [vmem:[#allocation3 + $0x30] sm:$0xff]
        %v1681 = vld [vmem:[#allocation3 + $0x38] sm:$0xff]
        %v1682 = vld [vmem:[#allocation3 + $0x40] sm:$0xff]
        %v1683 = vld [vmem:[#allocation3 + $0x48] sm:$0xff]
        %v1684 = vld [vmem:[#allocation3 + $0x50] sm:$0xff]
        %v1685 = vld [vmem:[#allocation3 + $0x58] sm:$0xff]
        %v1686 = vld [vmem:[#allocation3 + $0x60] sm:$0xff]
        %v1687 = vld [vmem:[#allocation3 + $0x68] sm:$0xff]
        %v1688 = vld [vmem:[#allocation3 + $0x70] sm:$0xff]
        %v1689 = vld [vmem:[#allocation3 + $0x78] sm:$0xff]
        %v1690 = vld [vmem:[#allocation3 + $0x80] sm:$0xff]
        %v1691 = vld [vmem:[#allocation3 + $0x88] sm:$0xff]
        %v1692 = vld [vmem:[#allocation3 + $0x90] sm:$0xff]
        %v1693 = vld [vmem:[#allocation3 + $0x98] sm:$0xff]
        %v1694 = vld [vmem:[#allocation3 + $0xa0] sm:$0xff]
        %v1695 = vld [vmem:[#allocation3 + $0xa8] sm:$0xff]
        %v1696 = vld [vmem:[#allocation3 + $0xb0] sm:$0xff]
        %v1697 = vld [vmem:[#allocation3 + $0xb8] sm:$0xff]
        %v1698 = vld [vmem:[#allocation3 + $0xc0] sm:$0xff]
        %v1699 = vld [vmem:[#allocation3 + $0xc8] sm:$0xff]
        %v1700 = vld [vmem:[#allocation3 + $0xd0] sm:$0xff]
        %v1701 = vld [vmem:[#allocation3 + $0xd8] sm:$0xff]
        %v1702 = vld [vmem:[#allocation3 + $0xe0] sm:$0xff]
        %v1703 = vld [vmem:[#allocation3 + $0xe8] sm:$0xff]
        %v1704 = vld [vmem:[#allocation3 + $0xf0] sm:$0xff]
        %v1705 = vld [vmem:[#allocation3 + $0xf8] sm:$0xff]
        %v1706 = vld [vmem:[#allocation2 + $0x2] sm:$0xff]
        %v1707 = vld [vmem:[#allocation2 + $0xa] sm:$0xff]
        %v1708 = vld [vmem:[#allocation2 + $0x12] sm:$0xff]
        %v1709 = vld [vmem:[#allocation2 + $0x1a] sm:$0xff]
        %v1710 = vld [vmem:[#allocation2 + $0x2a] sm:$0xff]
        %v1711 = vld [vmem:[#allocation2 + $0x32] sm:$0xff]
        %v1712 = vld [vmem:[#allocation2 + $0x3a] sm:$0xff]
        %v1713 = vld [vmem:[#allocation2 + $0x42] sm:$0xff]
        %v1714 = vld [vmem:[#allocation2 + $0x52] sm:$0xff]
        %v1715 = vld [vmem:[#allocation2 + $0x5a] sm:$0xff]
        %v1716 = vld [vmem:[#allocation2 + $0x62] sm:$0xff]
        %v1717 = vld [vmem:[#allocation2 + $0x6a] sm:$0xff]
        %v1718 = vld [vmem:[#allocation2 + $0x7a] sm:$0xff]
        %v1719 = vld [vmem:[#allocation2 + $0x82] sm:$0xff]
        %v1720 = vld [vmem:[#allocation2 + $0x8a] sm:$0xff]
        %v1721 = vld [vmem:[#allocation2 + $0x92] sm:$0xff]
        %v1722 = vld [vmem:[#allocation2 + $0xa2] sm:$0xff]
        %v1723 = vld [vmem:[#allocation2 + $0xaa] sm:$0xff]
        %v1724 = vld [vmem:[#allocation2 + $0xb2] sm:$0xff]
        %v1725 = vld [vmem:[#allocation2 + $0xba] sm:$0xff]
        %v1726 = vld [vmem:[#allocation2 + $0xca] sm:$0xff]
        %v1727 = vld [vmem:[#allocation2 + $0xd2] sm:$0xff]
        %v1728 = vld [vmem:[#allocation2 + $0xda] sm:$0xff]
        %v1729 = vld [vmem:[#allocation2 + $0xe2] sm:$0xff]
        %v1730 = vld [vmem:[#allocation2 + $0xf2] sm:$0xff]
        %v1731 = vld [vmem:[#allocation2 + $0xfa] sm:$0xff]
        %v1732 = vld [vmem:[#allocation2 + $0x102] sm:$0xff]
        %v1733 = vld [vmem:[#allocation2 + $0x10a] sm:$0xff]
        %v1734 = vld [vmem:[#allocation2 + $0x11a] sm:$0xff]
        %v1735 = vld [vmem:[#allocation2 + $0x122] sm:$0xff]
        %v1736 = vld [vmem:[#allocation2 + $0x12a] sm:$0xff]
        %v1737 = vld [vmem:[#allocation2 + $0x132] sm:$0xff]
        %s1738 = scalar_lea.vmem %s3, 32
        %v1739 = vld [vmem:[%s1738] sm:$0xff]
        %v1740 = vld [vmem:[%s1738 + $0x8] sm:$0x1]
        %v1742 = vsel %vm860, %v1706, 0
        %v1745 = vsel %vm860, %v1707, 0
        %v1748 = vsel %vm860, %v1708, 0
        %v1751 = vsel %vm860, %v1709, 0
        %v1754 = vsel %vm860, %v1710, 0
        %v1757 = vsel %vm860, %v1711, 0
        %v1760 = vsel %vm860, %v1712, 0
        %v1763 = vsel %vm860, %v1713, 0
        %v1766 = vsel %vm860, %v1714, 0
        %v1769 = vsel %vm860, %v1715, 0
        %v1772 = vsel %vm860, %v1716, 0
        %v1775 = vsel %vm860, %v1717, 0
        %v1778 = vsel %vm860, %v1718, 0
        %v1781 = vsel %vm860, %v1719, 0
        %v1784 = vsel %vm860, %v1720, 0
        %v1787 = vsel %vm860, %v1721, 0
        %v1790 = vsel %vm860, %v1722, 0
        %v1793 = vsel %vm860, %v1723, 0
        %v1796 = vsel %vm860, %v1724, 0
        %v1799 = vsel %vm860, %v1725, 0
        %v1802 = vsel %vm860, %v1726, 0
        %v1805 = vsel %vm860, %v1727, 0
        %v1808 = vsel %vm860, %v1728, 0
        %v1811 = vsel %vm860, %v1729, 0
        %v1814 = vsel %vm860, %v1730, 0
        %v1817 = vsel %vm860, %v1731, 0
        %v1820 = vsel %vm860, %v1732, 0
        %v1823 = vsel %vm860, %v1733, 0
        %v1826 = vsel %vm860, %v1734, 0
        %v1829 = vsel %vm860, %v1735, 0
        %v1832 = vsel %vm860, %v1736, 0
        %v1835 = vsel %vm860, %v1737, 0
        %v1838 = vsel %vm957, %v1740, 0
        %1840 = vmatprep.subr.mxu0 0.0
        %1841 = vmatpush1.msra.mxu0 0.0
        %1842 = vmatprep.subr.mxu0 0.0
        %1843 = vmatpush1.msra.mxu0 0.0
        %1844 = vmatprep.subr.mxu0 0.0
        %1845 = vmatpush1.msra.mxu0 0.0
        %1846 = vmatprep.subr.mxu0 0.0
        %1847 = vmatpush1.msra.mxu0 0.0
        %1848 = vmatprep.subr.mxu0 0.0
        %1849 = vmatpush1.msra.mxu0 0.0
        %1850 = vmatprep.subr.mxu0 0.0
        %1851 = vmatpush1.msra.mxu0 0.0
        %1852 = vmatprep.subr.mxu0 0.0
        %1853 = vmatpush1.msra.mxu0 0.0
        %1854 = vmatprep.subr.mxu0 0.0
        %1855 = vmatpush1.msra.mxu0 0.0
        %1856 = vmatprep.subr.mxu0 0.0
        %1857 = vmatpush1.msra.mxu0 0.0
        %1858 = vmatprep.subr.mxu0 0.0
        %1859 = vmatpush1.msra.mxu0 0.0
        %1860 = vmatprep.subr.mxu0 0.0
        %1861 = vmatpush1.msra.mxu0 0.0
        %1862 = vmatprep.subr.mxu0 0.0
        %1863 = vmatpush1.msra.mxu0 0.0
        %1864 = vmatprep.subr.mxu0 0.0
        %1865 = vmatpush1.msra.mxu0 0.0
        %1866 = vmatprep.subr.mxu0 0.0
        %1867 = vmatpush1.msra.mxu0 0.0
        %1868 = vmatprep.subr.mxu0 0.0
        %1869 = vmatpush1.msra.mxu0 %v1838
        %1870 = vmatprep.subr.mxu0 0.0
        %1871 = vmatpush1.msra.mxu0 %v1739
        %1872 = vmatprep.subr.mxu0 0.0
        %1873 = vmatpush2.msra.mxu0 0.0
        %1874 = vmatprep.subr.mxu0 0.0
        %1875 = vmatpush2.msra.mxu0 0.0
        %1876 = vmatprep.subr.mxu0 0.0
        %1877 = vmatpush2.msra.mxu0 0.0
        %1878 = vmatprep.subr.mxu0 0.0
        %1879 = vmatpush2.msra.mxu0 0.0
        %1880 = vmatprep.subr.mxu0 0.0
        %1881 = vmatpush2.msra.mxu0 0.0
        %1882 = vmatprep.subr.mxu0 0.0
        %1883 = vmatpush2.msra.mxu0 0.0
        %1884 = vmatprep.subr.mxu0 0.0
        %1885 = vmatpush2.msra.mxu0 0.0
        %1886 = vmatprep.subr.mxu0 0.0
        %1887 = vmatpush2.msra.mxu0 0.0
        %1888 = vmatprep.subr.mxu0 0.0
        %1889 = vmatpush2.msra.mxu0 0.0
        %1890 = vmatprep.subr.mxu0 0.0
        %1891 = vmatpush2.msra.mxu0 0.0
        %1892 = vmatprep.subr.mxu0 0.0
        %1893 = vmatpush2.msra.mxu0 0.0
        %1894 = vmatprep.subr.mxu0 0.0
        %1895 = vmatpush2.msra.mxu0 0.0
        %1896 = vmatprep.subr.mxu0 0.0
        %1897 = vmatpush2.msra.mxu0 0.0
        %1898 = vmatprep.subr.mxu0 0.0
        %1899 = vmatpush2.msra.mxu0 0.0
        %1900 = vmatprep.subr.mxu0 0.0
        %1901 = vmatpush2.msra.mxu0 0.0
        %1902 = vmatprep.subr.mxu0 0.0
        %1903 = vmatpush2.msra.mxu0 0.0
        %1904 = vmatprep.mubr.f32.mxu0 0.0
        %1905 = vmatmul.mubr.f32.gmra.mxu0 %v1742
        %v1906 = vpop.f32.mrf.mxu0
        %v1907 = vadd.f32 0.0, %v1906
        %v1908 = vpop.f32.mrf.mxu0
        %1909 = vmatprep.mubr.f32.mxu0 0.0
        %1910 = vmatmul.mubr.f32.gmra.mxu0 %v1745
        %v1911 = vpop.f32.mrf.mxu0
        %v1912 = vadd.f32 0.0, %v1911
        %v1913 = vpop.f32.mrf.mxu0
        %1914 = vmatprep.mubr.f32.mxu0 0.0
        %1915 = vmatmul.mubr.f32.gmra.mxu0 %v1748
        %v1916 = vpop.f32.mrf.mxu0
        %v1917 = vadd.f32 0.0, %v1916
        %v1918 = vpop.f32.mrf.mxu0
        %1919 = vmatprep.mubr.f32.mxu0 0.0
        %1920 = vmatmul.mubr.f32.gmra.mxu0 %v1751
        %v1921 = vpop.f32.mrf.mxu0
        %v1922 = vadd.f32 0.0, %v1921
        %v1923 = vpop.f32.mrf.mxu0
        %1924 = vmatprep.mubr.f32.mxu0 0.0
        %1925 = vmatmul.mubr.f32.gmra.mxu0 %v1754
        %v1926 = vpop.f32.mrf.mxu0
        %v1927 = vadd.f32 0.0, %v1926
        %v1928 = vpop.f32.mrf.mxu0
        %1929 = vmatprep.mubr.f32.mxu0 0.0
        %1930 = vmatmul.mubr.f32.gmra.mxu0 %v1757
        %v1931 = vpop.f32.mrf.mxu0
        %v1932 = vadd.f32 0.0, %v1931
        %v1933 = vpop.f32.mrf.mxu0
        %1934 = vmatprep.mubr.f32.mxu0 0.0
        %1935 = vmatmul.mubr.f32.gmra.mxu0 %v1760
        %v1936 = vpop.f32.mrf.mxu0
        %v1937 = vadd.f32 0.0, %v1936
        %v1938 = vpop.f32.mrf.mxu0
        %1939 = vmatprep.mubr.f32.mxu0 0.0
        %1940 = vmatmul.mubr.f32.gmra.mxu0 %v1763
        %v1941 = vpop.f32.mrf.mxu0
        %v1942 = vadd.f32 0.0, %v1941
        %v1943 = vpop.f32.mrf.mxu0
        %1944 = vmatprep.mubr.f32.mxu0 0.0
        %1945 = vmatmul.mubr.f32.gmra.mxu0 %v1766
        %v1946 = vpop.f32.mrf.mxu0
        %v1947 = vadd.f32 0.0, %v1946
        %v1948 = vpop.f32.mrf.mxu0
        %1949 = vmatprep.mubr.f32.mxu0 0.0
        %1950 = vmatmul.mubr.f32.gmra.mxu0 %v1769
        %v1951 = vpop.f32.mrf.mxu0
        %v1952 = vadd.f32 0.0, %v1951
        %v1953 = vpop.f32.mrf.mxu0
        %1954 = vmatprep.mubr.f32.mxu0 0.0
        %1955 = vmatmul.mubr.f32.gmra.mxu0 %v1772
        %v1956 = vpop.f32.mrf.mxu0
        %v1957 = vadd.f32 0.0, %v1956
        %v1958 = vpop.f32.mrf.mxu0
        %1959 = vmatprep.mubr.f32.mxu0 0.0
        %1960 = vmatmul.mubr.f32.gmra.mxu0 %v1775
        %v1961 = vpop.f32.mrf.mxu0
        %v1962 = vadd.f32 0.0, %v1961
        %v1963 = vpop.f32.mrf.mxu0
        %1964 = vmatprep.mubr.f32.mxu0 0.0
        %1965 = vmatmul.mubr.f32.gmra.mxu0 %v1778
        %v1966 = vpop.f32.mrf.mxu0
        %v1967 = vadd.f32 0.0, %v1966
        %v1968 = vpop.f32.mrf.mxu0
        %1969 = vmatprep.mubr.f32.mxu0 0.0
        %1970 = vmatmul.mubr.f32.gmra.mxu0 %v1781
        %v1971 = vpop.f32.mrf.mxu0
        %v1972 = vadd.f32 0.0, %v1971
        %v1973 = vpop.f32.mrf.mxu0
        %1974 = vmatprep.mubr.f32.mxu0 0.0
        %1975 = vmatmul.mubr.f32.gmra.mxu0 %v1784
        %v1976 = vpop.f32.mrf.mxu0
        %v1977 = vadd.f32 0.0, %v1976
        %v1978 = vpop.f32.mrf.mxu0
        %1979 = vmatprep.mubr.f32.mxu0 0.0
        %1980 = vmatmul.mubr.f32.gmra.mxu0 %v1787
        %v1981 = vpop.f32.mrf.mxu0
        %v1982 = vadd.f32 0.0, %v1981
        %v1983 = vpop.f32.mrf.mxu0
        %1984 = vmatprep.mubr.f32.mxu0 0.0
        %1985 = vmatmul.mubr.f32.gmra.mxu0 %v1790
        %v1986 = vpop.f32.mrf.mxu0
        %v1987 = vadd.f32 0.0, %v1986
        %v1988 = vpop.f32.mrf.mxu0
        %1989 = vmatprep.mubr.f32.mxu0 0.0
        %1990 = vmatmul.mubr.f32.gmra.mxu0 %v1793
        %v1991 = vpop.f32.mrf.mxu0
        %v1992 = vadd.f32 0.0, %v1991
        %v1993 = vpop.f32.mrf.mxu0
        %1994 = vmatprep.mubr.f32.mxu0 0.0
        %1995 = vmatmul.mubr.f32.gmra.mxu0 %v1796
        %v1996 = vpop.f32.mrf.mxu0
        %v1997 = vadd.f32 0.0, %v1996
        %v1998 = vpop.f32.mrf.mxu0
        %1999 = vmatprep.mubr.f32.mxu0 0.0
        %2000 = vmatmul.mubr.f32.gmra.mxu0 %v1799
        %v2001 = vpop.f32.mrf.mxu0
        %v2002 = vadd.f32 0.0, %v2001
        %v2003 = vpop.f32.mrf.mxu0
        %2004 = vmatprep.mubr.f32.mxu0 0.0
        %2005 = vmatmul.mubr.f32.gmra.mxu0 %v1802
        %v2006 = vpop.f32.mrf.mxu0
        %v2007 = vadd.f32 0.0, %v2006
        %v2008 = vpop.f32.mrf.mxu0
        %2009 = vmatprep.mubr.f32.mxu0 0.0
        %2010 = vmatmul.mubr.f32.gmra.mxu0 %v1805
        %v2011 = vpop.f32.mrf.mxu0
        %v2012 = vadd.f32 0.0, %v2011
        %v2013 = vpop.f32.mrf.mxu0
        %2014 = vmatprep.mubr.f32.mxu0 0.0
        %2015 = vmatmul.mubr.f32.gmra.mxu0 %v1808
        %v2016 = vpop.f32.mrf.mxu0
        %v2017 = vadd.f32 0.0, %v2016
        %v2018 = vpop.f32.mrf.mxu0
        %2019 = vmatprep.mubr.f32.mxu0 0.0
        %2020 = vmatmul.mubr.f32.gmra.mxu0 %v1811
        %v2021 = vpop.f32.mrf.mxu0
        %v2022 = vadd.f32 0.0, %v2021
        %v2023 = vpop.f32.mrf.mxu0
        %2024 = vmatprep.mubr.f32.mxu0 0.0
        %2025 = vmatmul.mubr.f32.gmra.mxu0 %v1814
        %v2026 = vpop.f32.mrf.mxu0
        %v2027 = vadd.f32 0.0, %v2026
        %v2028 = vpop.f32.mrf.mxu0
        %2029 = vmatprep.mubr.f32.mxu0 0.0
        %2030 = vmatmul.mubr.f32.gmra.mxu0 %v1817
        %v2031 = vpop.f32.mrf.mxu0
        %v2032 = vadd.f32 0.0, %v2031
        %v2033 = vpop.f32.mrf.mxu0
        %2034 = vmatprep.mubr.f32.mxu0 0.0
        %2035 = vmatmul.mubr.f32.gmra.mxu0 %v1820
        %v2036 = vpop.f32.mrf.mxu0
        %v2037 = vadd.f32 0.0, %v2036
        %v2038 = vpop.f32.mrf.mxu0
        %2039 = vmatprep.mubr.f32.mxu0 0.0
        %2040 = vmatmul.mubr.f32.gmra.mxu0 %v1823
        %v2041 = vpop.f32.mrf.mxu0
        %v2042 = vadd.f32 0.0, %v2041
        %v2043 = vpop.f32.mrf.mxu0
        %2044 = vmatprep.mubr.f32.mxu0 0.0
        %2045 = vmatmul.mubr.f32.gmra.mxu0 %v1826
        %v2046 = vpop.f32.mrf.mxu0
        %v2047 = vadd.f32 0.0, %v2046
        %v2048 = vpop.f32.mrf.mxu0
        %2049 = vmatprep.mubr.f32.mxu0 0.0
        %2050 = vmatmul.mubr.f32.gmra.mxu0 %v1829
        %v2051 = vpop.f32.mrf.mxu0
        %v2052 = vadd.f32 0.0, %v2051
        %v2053 = vpop.f32.mrf.mxu0
        %2054 = vmatprep.mubr.f32.mxu0 0.0
        %2055 = vmatmul.mubr.f32.gmra.mxu0 %v1832
        %v2056 = vpop.f32.mrf.mxu0
        %v2057 = vadd.f32 0.0, %v2056
        %v2058 = vpop.f32.mrf.mxu0
        %2059 = vmatprep.mubr.f32.mxu0 0.0
        %2060 = vmatmul.mubr.f32.gmra.mxu0 %v1835
        %v2061 = vpop.f32.mrf.mxu0
        %v2062 = vadd.f32 0.0, %v2061
        %v2063 = vpop.f32.mrf.mxu0
        %2064 = vdwg.mxu0
        %v2065 = vadd.f32 %v1674, %v1907
        %v2066 = vadd.f32 %v1675, %v1912
        %v2067 = vadd.f32 %v1676, %v1917
        %v2068 = vadd.f32 %v1677, %v1922
        %v2069 = vadd.f32 %v1678, %v1927
        %v2070 = vadd.f32 %v1679, %v1932
        %v2071 = vadd.f32 %v1680, %v1937
        %v2072 = vadd.f32 %v1681, %v1942
        %v2073 = vadd.f32 %v1682, %v1947
        %v2074 = vadd.f32 %v1683, %v1952
        %v2075 = vadd.f32 %v1684, %v1957
        %v2076 = vadd.f32 %v1685, %v1962
        %v2077 = vadd.f32 %v1686, %v1967
        %v2078 = vadd.f32 %v1687, %v1972
        %v2079 = vadd.f32 %v1688, %v1977
        %v2080 = vadd.f32 %v1689, %v1982
        %v2081 = vadd.f32 %v1690, %v1987
        %v2082 = vadd.f32 %v1691, %v1992
        %v2083 = vadd.f32 %v1692, %v1997
        %v2084 = vadd.f32 %v1693, %v2002
        %v2085 = vadd.f32 %v1694, %v2007
        %v2086 = vadd.f32 %v1695, %v2012
        %v2087 = vadd.f32 %v1696, %v2017
        %v2088 = vadd.f32 %v1697, %v2022
        %v2089 = vadd.f32 %v1698, %v2027
        %v2090 = vadd.f32 %v1699, %v2032
        %v2091 = vadd.f32 %v1700, %v2037
        %v2092 = vadd.f32 %v1701, %v2042
        %v2093 = vadd.f32 %v1702, %v2047
        %v2094 = vadd.f32 %v1703, %v2052
        %v2095 = vadd.f32 %v1704, %v2057
        %v2096 = vadd.f32 %v1705, %v2062
        %2097 = vst.msk [vmem:[#allocation3] sm:$0xff] %vm1186, %v2065
        %2098 = vst.msk [vmem:[#allocation3 + $0x8] sm:$0xff] %vm1186, %v2066
        %2099 = vst.msk [vmem:[#allocation3 + $0x10] sm:$0xff] %vm1186, %v2067
        %2100 = vst.msk [vmem:[#allocation3 + $0x18] sm:$0xff] %vm1186, %v2068
        %2101 = vst.msk [vmem:[#allocation3 + $0x20] sm:$0xff] %vm1186, %v2069
        %2102 = vst.msk [vmem:[#allocation3 + $0x28] sm:$0xff] %vm1186, %v2070
        %2103 = vst.msk [vmem:[#allocation3 + $0x30] sm:$0xff] %vm1186, %v2071
        %2104 = vst.msk [vmem:[#allocation3 + $0x38] sm:$0xff] %vm1186, %v2072
        %2105 = vst.msk [vmem:[#allocation3 + $0x40] sm:$0xff] %vm1186, %v2073
        %2106 = vst.msk [vmem:[#allocation3 + $0x48] sm:$0xff] %vm1186, %v2074
        %2107 = vst.msk [vmem:[#allocation3 + $0x50] sm:$0xff] %vm1186, %v2075
        %2108 = vst.msk [vmem:[#allocation3 + $0x58] sm:$0xff] %vm1186, %v2076
        %2109 = vst.msk [vmem:[#allocation3 + $0x60] sm:$0xff] %vm1186, %v2077
        %2110 = vst.msk [vmem:[#allocation3 + $0x68] sm:$0xff] %vm1186, %v2078
        %2111 = vst.msk [vmem:[#allocation3 + $0x70] sm:$0xff] %vm1186, %v2079
        %2112 = vst.msk [vmem:[#allocation3 + $0x78] sm:$0xff] %vm1186, %v2080
        %2113 = vst.msk [vmem:[#allocation3 + $0x80] sm:$0xff] %vm1186, %v2081
        %2114 = vst.msk [vmem:[#allocation3 + $0x88] sm:$0xff] %vm1186, %v2082
        %2115 = vst.msk [vmem:[#allocation3 + $0x90] sm:$0xff] %vm1186, %v2083
        %2116 = vst.msk [vmem:[#allocation3 + $0x98] sm:$0xff] %vm1186, %v2084
        %2117 = vst.msk [vmem:[#allocation3 + $0xa0] sm:$0xff] %vm1186, %v2085
        %2118 = vst.msk [vmem:[#allocation3 + $0xa8] sm:$0xff] %vm1186, %v2086
        %2119 = vst.msk [vmem:[#allocation3 + $0xb0] sm:$0xff] %vm1186, %v2087
        %2120 = vst.msk [vmem:[#allocation3 + $0xb8] sm:$0xff] %vm1186, %v2088
        %2121 = vst.msk [vmem:[#allocation3 + $0xc0] sm:$0xff] %vm1186, %v2089
        %2122 = vst.msk [vmem:[#allocation3 + $0xc8] sm:$0xff] %vm1186, %v2090
        %2123 = vst.msk [vmem:[#allocation3 + $0xd0] sm:$0xff] %vm1186, %v2091
        %2124 = vst.msk [vmem:[#allocation3 + $0xd8] sm:$0xff] %vm1186, %v2092
        %2125 = vst.msk [vmem:[#allocation3 + $0xe0] sm:$0xff] %vm1186, %v2093
        %2126 = vst.msk [vmem:[#allocation3 + $0xe8] sm:$0xff] %vm1186, %v2094
        %2127 = vst.msk [vmem:[#allocation3 + $0xf0] sm:$0xff] %vm1186, %v2095
        %2128 = vst.msk [vmem:[#allocation3 + $0xf8] sm:$0xff] %vm1186, %v2096
        %v2129 = vld [vmem:[#allocation3] sm:$0xff]
        %v2130 = vld [vmem:[#allocation3 + $0x8] sm:$0xff]
        %v2131 = vld [vmem:[#allocation3 + $0x10] sm:$0xff]
        %v2132 = vld [vmem:[#allocation3 + $0x18] sm:$0xff]
        %v2133 = vld [vmem:[#allocation3 + $0x20] sm:$0xff]
        %v2134 = vld [vmem:[#allocation3 + $0x28] sm:$0xff]
        %v2135 = vld [vmem:[#allocation3 + $0x30] sm:$0xff]
        %v2136 = vld [vmem:[#allocation3 + $0x38] sm:$0xff]
        %v2137 = vld [vmem:[#allocation3 + $0x40] sm:$0xff]
        %v2138 = vld [vmem:[#allocation3 + $0x48] sm:$0xff]
        %v2139 = vld [vmem:[#allocation3 + $0x50] sm:$0xff]
        %v2140 = vld [vmem:[#allocation3 + $0x58] sm:$0xff]
        %v2141 = vld [vmem:[#allocation3 + $0x60] sm:$0xff]
        %v2142 = vld [vmem:[#allocation3 + $0x68] sm:$0xff]
        %v2143 = vld [vmem:[#allocation3 + $0x70] sm:$0xff]
        %v2144 = vld [vmem:[#allocation3 + $0x78] sm:$0xff]
        %v2145 = vld [vmem:[#allocation3 + $0x80] sm:$0xff]
        %v2146 = vld [vmem:[#allocation3 + $0x88] sm:$0xff]
        %v2147 = vld [vmem:[#allocation3 + $0x90] sm:$0xff]
        %v2148 = vld [vmem:[#allocation3 + $0x98] sm:$0xff]
        %v2149 = vld [vmem:[#allocation3 + $0xa0] sm:$0xff]
        %v2150 = vld [vmem:[#allocation3 + $0xa8] sm:$0xff]
        %v2151 = vld [vmem:[#allocation3 + $0xb0] sm:$0xff]
        %v2152 = vld [vmem:[#allocation3 + $0xb8] sm:$0xff]
        %v2153 = vld [vmem:[#allocation3 + $0xc0] sm:$0xff]
        %v2154 = vld [vmem:[#allocation3 + $0xc8] sm:$0xff]
        %v2155 = vld [vmem:[#allocation3 + $0xd0] sm:$0xff]
        %v2156 = vld [vmem:[#allocation3 + $0xd8] sm:$0xff]
        %v2157 = vld [vmem:[#allocation3 + $0xe0] sm:$0xff]
        %v2158 = vld [vmem:[#allocation3 + $0xe8] sm:$0xff]
        %v2159 = vld [vmem:[#allocation3 + $0xf0] sm:$0xff]
        %v2160 = vld [vmem:[#allocation3 + $0xf8] sm:$0xff]
        %v2161 = vld [vmem:[%s4] sm:$0x1]
        %v2163 = vlaneseq
        %v2164 = vshrl.u32 %v2163, 7
        %v2165 = vsub.s32 0, %v2164
        %v2166 = vrot.slane %v2161, %v2165
        %v2168 = vadd.f32 %v2129, %v2166
        %v2169 = vadd.f32 %v2130, %v2166
        %v2170 = vadd.f32 %v2131, %v2166
        %v2171 = vadd.f32 %v2132, %v2166
        %v2172 = vadd.f32 %v2133, %v2166
        %v2173 = vadd.f32 %v2134, %v2166
        %v2174 = vadd.f32 %v2135, %v2166
        %v2175 = vadd.f32 %v2136, %v2166
        %v2176 = vadd.f32 %v2137, %v2166
        %v2177 = vadd.f32 %v2138, %v2166
        %v2178 = vadd.f32 %v2139, %v2166
        %v2179 = vadd.f32 %v2140, %v2166
        %v2180 = vadd.f32 %v2141, %v2166
        %v2181 = vadd.f32 %v2142, %v2166
        %v2182 = vadd.f32 %v2143, %v2166
        %v2183 = vadd.f32 %v2144, %v2166
        %v2184 = vadd.f32 %v2145, %v2166
        %v2185 = vadd.f32 %v2146, %v2166
        %v2186 = vadd.f32 %v2147, %v2166
        %v2187 = vadd.f32 %v2148, %v2166
        %v2188 = vadd.f32 %v2149, %v2166
        %v2189 = vadd.f32 %v2150, %v2166
        %v2190 = vadd.f32 %v2151, %v2166
        %v2191 = vadd.f32 %v2152, %v2166
        %v2192 = vadd.f32 %v2153, %v2166
        %v2193 = vadd.f32 %v2154, %v2166
        %v2194 = vadd.f32 %v2155, %v2166
        %v2195 = vadd.f32 %v2156, %v2166
        %v2196 = vadd.f32 %v2157, %v2166
        %v2197 = vadd.f32 %v2158, %v2166
        %v2198 = vadd.f32 %v2159, %v2166
        %v2199 = vadd.f32 %v2160, %v2166
        %v2200 = vmax.f32 %v2168, 0.0
        %v2201 = vmax.f32 %v2169, 0.0
        %v2202 = vmax.f32 %v2170, 0.0
        %v2203 = vmax.f32 %v2171, 0.0
        %v2204 = vmax.f32 %v2172, 0.0
        %v2205 = vmax.f32 %v2173, 0.0
        %v2206 = vmax.f32 %v2174, 0.0
        %v2207 = vmax.f32 %v2175, 0.0
        %v2208 = vmax.f32 %v2176, 0.0
        %v2209 = vmax.f32 %v2177, 0.0
        %v2210 = vmax.f32 %v2178, 0.0
        %v2211 = vmax.f32 %v2179, 0.0
        %v2212 = vmax.f32 %v2180, 0.0
        %v2213 = vmax.f32 %v2181, 0.0
        %v2214 = vmax.f32 %v2182, 0.0
        %v2215 = vmax.f32 %v2183, 0.0
        %v2216 = vmax.f32 %v2184, 0.0
        %v2217 = vmax.f32 %v2185, 0.0
        %v2218 = vmax.f32 %v2186, 0.0
        %v2219 = vmax.f32 %v2187, 0.0
        %v2220 = vmax.f32 %v2188, 0.0
        %v2221 = vmax.f32 %v2189, 0.0
        %v2222 = vmax.f32 %v2190, 0.0
        %v2223 = vmax.f32 %v2191, 0.0
        %v2224 = vmax.f32 %v2192, 0.0
        %v2225 = vmax.f32 %v2193, 0.0
        %v2226 = vmax.f32 %v2194, 0.0
        %v2227 = vmax.f32 %v2195, 0.0
        %v2228 = vmax.f32 %v2196, 0.0
        %v2229 = vmax.f32 %v2197, 0.0
        %v2230 = vmax.f32 %v2198, 0.0
        %v2231 = vmax.f32 %v2199, 0.0
        %v2232 = vpack.c.bf16 %v2201, %v2200
        %v2233 = vpack.c.bf16 %v2203, %v2202
        %v2234 = vpack.c.bf16 %v2205, %v2204
        %v2235 = vpack.c.bf16 %v2207, %v2206
        %v2236 = vpack.c.bf16 %v2209, %v2208
        %v2237 = vpack.c.bf16 %v2211, %v2210
        %v2238 = vpack.c.bf16 %v2213, %v2212
        %v2239 = vpack.c.bf16 %v2215, %v2214
        %v2240 = vpack.c.bf16 %v2217, %v2216
        %v2241 = vpack.c.bf16 %v2219, %v2218
        %v2242 = vpack.c.bf16 %v2221, %v2220
        %v2243 = vpack.c.bf16 %v2223, %v2222
        %v2244 = vpack.c.bf16 %v2225, %v2224
        %v2245 = vpack.c.bf16 %v2227, %v2226
        %v2246 = vpack.c.bf16 %v2229, %v2228
        %v2247 = vpack.c.bf16 %v2231, %v2230
        %v2264 = vunpack.c.l.b16 %v2232
        %v2265 = vunpack.c.h.b16 %v2232
        %v2266 = vunpack.c.l.b16 %v2233
        %v2267 = vunpack.c.h.b16 %v2233
        %v2268 = vunpack.c.l.b16 %v2234
        %v2269 = vunpack.c.h.b16 %v2234
        %v2270 = vunpack.c.l.b16 %v2235
        %v2271 = vunpack.c.h.b16 %v2235
        %v2272 = vunpack.c.l.b16 %v2236
        %v2273 = vunpack.c.h.b16 %v2236
        %v2274 = vunpack.c.l.b16 %v2237
        %v2275 = vunpack.c.h.b16 %v2237
        %v2276 = vunpack.c.l.b16 %v2238
        %v2277 = vunpack.c.h.b16 %v2238
        %v2278 = vunpack.c.l.b16 %v2239
        %v2279 = vunpack.c.h.b16 %v2239
        %v2280 = vunpack.c.l.b16 %v2240
        %v2281 = vunpack.c.h.b16 %v2240
        %v2282 = vunpack.c.l.b16 %v2241
        %v2283 = vunpack.c.h.b16 %v2241
        %v2284 = vunpack.c.l.b16 %v2242
        %v2285 = vunpack.c.h.b16 %v2242
        %v2286 = vunpack.c.l.b16 %v2243
        %v2287 = vunpack.c.h.b16 %v2243
        %v2288 = vunpack.c.l.b16 %v2244
        %v2289 = vunpack.c.h.b16 %v2244
        %v2290 = vunpack.c.l.b16 %v2245
        %v2291 = vunpack.c.h.b16 %v2245
        %v2292 = vunpack.c.l.b16 %v2246
        %v2293 = vunpack.c.h.b16 %v2246
        %v2294 = vunpack.c.l.b16 %v2247
        %v2295 = vunpack.c.h.b16 %v2247
        %v2296 = vpack.c.b16 %v2264, %v2264
        %v2297 = vpack.c.b16 %v2265, %v2265
        %v2298 = vpack.c.b16 %v2266, %v2266
        %v2299 = vpack.c.b16 %v2267, %v2267
        %v2300 = vpack.c.b16 %v2268, %v2268
        %v2301 = vpack.c.b16 %v2269, %v2269
        %v2302 = vpack.c.b16 %v2270, %v2270
        %v2303 = vpack.c.b16 %v2271, %v2271
        %v2304 = vpack.c.b16 %v2272, %v2272
        %v2305 = vpack.c.b16 %v2273, %v2273
        %v2306 = vpack.c.b16 %v2274, %v2274
        %v2307 = vpack.c.b16 %v2275, %v2275
        %v2308 = vpack.c.b16 %v2276, %v2276
        %v2309 = vpack.c.b16 %v2277, %v2277
        %v2310 = vpack.c.b16 %v2278, %v2278
        %v2311 = vpack.c.b16 %v2279, %v2279
        %v2312 = vpack.c.b16 %v2280, %v2280
        %v2313 = vpack.c.b16 %v2281, %v2281
        %v2314 = vpack.c.b16 %v2282, %v2282
        %v2315 = vpack.c.b16 %v2283, %v2283
        %v2316 = vpack.c.b16 %v2284, %v2284
        %v2317 = vpack.c.b16 %v2285, %v2285
        %v2318 = vpack.c.b16 %v2286, %v2286
        %v2319 = vpack.c.b16 %v2287, %v2287
        %v2320 = vpack.c.b16 %v2288, %v2288
        %v2321 = vpack.c.b16 %v2289, %v2289
        %v2322 = vpack.c.b16 %v2290, %v2290
        %v2323 = vpack.c.b16 %v2291, %v2291
        %v2324 = vpack.c.b16 %v2292, %v2292
        %v2325 = vpack.c.b16 %v2293, %v2293
        %v2326 = vpack.c.b16 %v2294, %v2294
        %v2327 = vpack.c.b16 %v2295, %v2295
        %vm2360 = vcmask 519168
        %2361 = vst.msk [vmem:[%s361] sm:$0xf] %vm2360, %v2296
        %2362 = vst.msk [vmem:[%s361 + $0x4] sm:$0xf] %vm2360, %v2297
        %2363 = vst.msk [vmem:[%s361 + $0x8] sm:$0xf] %vm2360, %v2298
        %2364 = vst.msk [vmem:[%s361 + $0xc] sm:$0xf] %vm2360, %v2299
        %2365 = vst.msk [vmem:[%s361 + $0x10] sm:$0xf] %vm2360, %v2300
        %2366 = vst.msk [vmem:[%s361 + $0x14] sm:$0xf] %vm2360, %v2301
        %2367 = vst.msk [vmem:[%s361 + $0x18] sm:$0xf] %vm2360, %v2302
        %2368 = vst.msk [vmem:[%s361 + $0x1c] sm:$0xf] %vm2360, %v2303
        %2369 = vst.msk [vmem:[%s361 + $0x20] sm:$0xf] %vm2360, %v2304
        %2370 = vst.msk [vmem:[%s361 + $0x24] sm:$0xf] %vm2360, %v2305
        %2371 = vst.msk [vmem:[%s361 + $0x28] sm:$0xf] %vm2360, %v2306
        %2372 = vst.msk [vmem:[%s361 + $0x2c] sm:$0xf] %vm2360, %v2307
        %2373 = vst.msk [vmem:[%s361 + $0x30] sm:$0xf] %vm2360, %v2308
        %2374 = vst.msk [vmem:[%s361 + $0x34] sm:$0xf] %vm2360, %v2309
        %2375 = vst.msk [vmem:[%s361 + $0x38] sm:$0xf] %vm2360, %v2310
        %2376 = vst.msk [vmem:[%s361 + $0x3c] sm:$0xf] %vm2360, %v2311
        %2377 = vst.msk [vmem:[%s361 + $0x40] sm:$0xf] %vm2360, %v2312
        %2378 = vst.msk [vmem:[%s361 + $0x44] sm:$0xf] %vm2360, %v2313
        %2379 = vst.msk [vmem:[%s361 + $0x48] sm:$0xf] %vm2360, %v2314
        %2380 = vst.msk [vmem:[%s361 + $0x4c] sm:$0xf] %vm2360, %v2315
        %2381 = vst.msk [vmem:[%s361 + $0x50] sm:$0xf] %vm2360, %v2316
        %2382 = vst.msk [vmem:[%s361 + $0x54] sm:$0xf] %vm2360, %v2317
        %2383 = vst.msk [vmem:[%s361 + $0x58] sm:$0xf] %vm2360, %v2318
        %2384 = vst.msk [vmem:[%s361 + $0x5c] sm:$0xf] %vm2360, %v2319
        %2385 = vst.msk [vmem:[%s361 + $0x60] sm:$0xf] %vm2360, %v2320
        %2386 = vst.msk [vmem:[%s361 + $0x64] sm:$0xf] %vm2360, %v2321
        %2387 = vst.msk [vmem:[%s361 + $0x68] sm:$0xf] %vm2360, %v2322
        %2388 = vst.msk [vmem:[%s361 + $0x6c] sm:$0xf] %vm2360, %v2323
        %2389 = vst.msk [vmem:[%s361 + $0x70] sm:$0xf] %vm2360, %v2324
        %2390 = vst.msk [vmem:[%s361 + $0x74] sm:$0xf] %vm2360, %v2325
        %2391 = vst.msk [vmem:[%s361 + $0x78] sm:$0xf] %vm2360, %v2326
        %2392 = vst.msk [vmem:[%s361 + $0x7c] sm:$0xf] %vm2360, %v2327
        %s2393 = sand.u32 %s205, 1
        %s2394 = scalar_lea.sflag [#allocation5], %s2393
        %s2395 = sand.u32 %s205, 1
        %s2396 = smul.addr %s2395, 128
        %s2397 = scalar_lea.vmem [#allocation4], %s2396
        // Predicated region
        $region45: #{tpu_custom_call.1} parent=43 // pred_check
          %p2398 = pneg %p215
        $region46: #{tpu_custom_call.1} parent=43 // pred_check_branch
          %2400 = sbr.rel (%p2398) target = $region48
        $region47: #{tpu_custom_call.1} parent=43 // pred_region
          %s2401 = smul.u32 8, %s25
          %s2403 = ssub.s32 2048, 2048
          %2404 = vsyncadd %s2394, %s2403
          %s2405 = smul.addr %s2401, 4
          %s2406 = smul.addr %s24, 128
          %s2407 = sadd.s32 %s2405, %s2406
          %s2408 = smul.addr %s2407, 64
          %s2409 = scalar_lea.hbm %s6, %s2408
          %s2410 = sshll.u32 %s2397, 4
          %s2411 = int_to_ptr.vmem [resolvable:$true] %s2410
          %2416 = dma.vmem_to_hbm [thread:$0]  %s2411, 2048, %s2409, %s2394, 64, 64, 4
        $region48: #{tpu_custom_call.1} parent=43 // pred_fallthru
          _
      $region44: #{tpu_custom_call.1} parent=5 // pred_fallthru
        _
      %p2417 = scmp.le.s32.totalorder 2, %s15
      // Predicated region
      $region49: #{tpu_custom_call.1} parent=5 // pred_check
        %p2418 = pneg %p2417
      $region50: #{tpu_custom_call.1} parent=5 // pred_check_branch
        %2420 = sbr.rel (%p2418) target = $region52
      $region51: #{tpu_custom_call.1} parent=5 // pred_region
        %s2421 = ssub.s32 %s15, 2
        // Predicated region
        $region53: #{tpu_custom_call.1} parent=51 // pred_check
          %p2422 = pneg %p221
        $region54: #{tpu_custom_call.1} parent=51 // pred_check_branch
          %2424 = sbr.rel (%p2422) target = $region56
        $region55: #{tpu_custom_call.1} parent=51 // pred_region
          %s2425 = sand.u32 %s206, 1
          %s2426 = scalar_lea.sflag [#allocation5], %s2425
          %s2427 = sand.u32 %s206, 1
          %s2428 = smul.addr %s2427, 128
          %s2429 = scalar_lea.vmem [#allocation4], %s2428
          %2430 = dma.done %s2426, 2048
        $region56: #{tpu_custom_call.1} parent=51 // pred_fallthru
          _
      $region52: #{tpu_custom_call.1} parent=5 // pred_fallthru
        _
    $region6: #{tpu_custom_call.1} parent=1 // loop_footer
      %s19 = sadd.s32 1, %s15
    $region7: #{tpu_custom_call.1} parent=1 // loop_footer_branch
      %14 = sbr.rel target = $region3
    $region8: #{tpu_custom_call.1} parent=1 // loop_exit
      _
    %2431 = vsyncpa [#allocation5], 1
    %s2432 = scalar_lea.sflag [#allocation5], 1
    %2433 = vsyncpa %s2432, 1

</llo_original>
